<compile_context>
chip_gen: v7x
topology: tpu7x:2x2x1
jax: 0.10.0
libtpu: 0.0.40
codegen_flags: <defaults>
</compile_context>

<pallas_src>
import functools
import math

import jax
import jax.numpy as jnp
import numpy as np
from jax.experimental import pallas as pl
from jax.experimental.pallas import tpu as pltpu

EPS = 1e-5  # PyTorch InstanceNorm2d default (affine=False, biased variance)


# ---------------------------------------------------------------------------
# Kernel
# ---------------------------------------------------------------------------
def _in_relu_rows(h):
    """InstanceNorm (biased var, eps=1e-5) + ReLU over the lane (spatial) axis.

    h: (C, S) with channels on sublanes, flattened spatial on lanes.
    One-pass stats via sum / sum-of-squares (halves the cross-lane reductions).
    """
    inv_n = 1.0 / h.shape[1]
    s1 = jnp.sum(h, axis=1, keepdims=True)
    s2 = jnp.sum(h * h, axis=1, keepdims=True)
    m = s1 * inv_n
    v = jnp.maximum(s2 * inv_n - m * m, 0.0)
    return jnp.maximum((h - m) * jax.lax.rsqrt(v + EPS), 0.0)


def _decoder_fused_kernel(x_ref, w1_ref, wtaps_ref, spread_ref, w2_ref, o_ref,
                          *, kk):
    # x_ref      : (1, CIN, H*W)          input block (NCHW, spatial flattened)
    # w1_ref     : (CMID, CIN)            1x1 conv1 weight
    # wtaps_ref  : (k*k, CMID, CMID)      per-tap equivalent forward-conv weight
    # spread_ref : (k*k, H*W, S_OUT)      per-tap one-hot spatial scatter matrix
    # w2_ref     : (COUT, CMID)           1x1 conv2 weight
    # o_ref      : (1, COUT, S_OUT)       lane-dense NCHW output block
    x = x_ref[0]                                                    # (CIN, H*W)

    # --- conv1: 1x1 conv + IN + ReLU (channels-first matmul) -----------------
    y1 = jnp.dot(w1_ref[...], x, preferred_element_type=jnp.float32)
    y1 = _in_relu_rows(y1)                                          # (CMID, H*W)

    # --- tp_conv: accumulate k*k taps; each tap is a small channel-mix matmul
    #     followed by a one-hot spatial scatter matmul (all 2-D, no relayouts).
    acc = None
    for tap in range(kk):                                           # static unroll
        z = jnp.dot(wtaps_ref[tap], y1,
                    preferred_element_type=jnp.float32)             # (CMID, H*W)
        c = jnp.dot(z, spread_ref[tap],
                    preferred_element_type=jnp.float32)             # (CMID, S_OUT)
        acc = c if acc is None else acc + c
    h2 = _in_relu_rows(acc)                                         # (CMID, S_OUT)

    # --- conv2: 1x1 conv + IN + ReLU; (COUT, S_OUT) store == NCHW ------------
    o = jnp.dot(w2_ref[...], h2, preferred_element_type=jnp.float32)
    o_ref[0] = _in_relu_rows(o)


# ---------------------------------------------------------------------------
# Wrapper
# ---------------------------------------------------------------------------
def _make_tap_spreads(H, W, HOUT, WOUT, k, s, pad_lo):
    """(k*k, H*W, HOUT*WOUT) one-hot matrices: for tap (dy, dx), row iy*W+ix has
    a 1 at output position (pad_lo + iy*s - dy, pad_lo + ix*s - dx) if in range.
    This fuses zero-insertion, padding and the conv window into one operator."""
    S = np.zeros((k * k, H * W, HOUT * WOUT), np.float32)
    for dy in range(k):
        for dx in range(k):
            tap = dy * k + dx
            for iy in range(H):
                oy = pad_lo + iy * s - dy
                if not 0 <= oy < HOUT:
                    continue
                for ix in range(W):
                    ox = pad_lo + ix * s - dx
                    if not 0 <= ox < WOUT:
                        continue
                    S[tap, iy * W + ix, oy * WOUT + ox] = 1.0
    return jnp.asarray(S)


def decoder_forward(x_nchw, w1_mat, wt_taps, w2_mat, *, k, s, p, op):
    """x_nchw: (N, CIN, H, W) float32.  Returns (N, COUT, HOUT, WOUT) (NCHW)."""
    N, CIN, H, W = x_nchw.shape
    CMID = w1_mat.shape[0]
    COUT = w2_mat.shape[0]
    HW = H * W

    pad_lo = k - 1 - p
    assert pad_lo >= 0 and (k - 1 - p + op) >= 0, \
        "negative equivalent padding unsupported"
    HOUT = (H - 1) * s - 2 * p + k + op
    WOUT = (W - 1) * s - 2 * p + k + op
    S_OUT = HOUT * WOUT

    x = x_nchw.reshape(N, CIN, HW)          # free: merge minor dims, stays NCHW
    spread = _make_tap_spreads(H, W, HOUT, WOUT, k, s, pad_lo)

    kernel = functools.partial(_decoder_fused_kernel, kk=k * k)
    out = pl.pallas_call(
        kernel,
        out_shape=jax.ShapeDtypeStruct((N, COUT, S_OUT), jnp.float32),
        grid=(N,),
        in_specs=[pl.BlockSpec((1, CIN, HW), lambda n: (n, 0, 0)),
                  pl.BlockSpec((CMID, CIN), lambda n: (0, 0)),
                  pl.BlockSpec((k * k, CMID, CMID), lambda n: (0, 0, 0)),
                  pl.BlockSpec((k * k, HW, S_OUT), lambda n: (0, 0, 0)),
                  pl.BlockSpec((COUT, CMID), lambda n: (0, 0))],
        out_specs=pl.BlockSpec((1, COUT, S_OUT), lambda n: (n, 0, 0)),
        compiler_params=pltpu.CompilerParams(
            dimension_semantics=("parallel",)),
    )(x, w1_mat, wt_taps, spread, w2_mat)

    # free: split minor dim, output is already channels-first (NCHW)
    return out.reshape(N, COUT, HOUT, WOUT)


# ---------------------------------------------------------------------------
# Pure-JAX reference (independent of the kernel's decomposition)
# ---------------------------------------------------------------------------
def _instnorm_relu_nhwc(y):
    m = jnp.mean(y, axis=(1, 2), keepdims=True)
    v = jnp.mean((y - m) ** 2, axis=(1, 2), keepdims=True)
    return jnp.maximum((y - m) * jax.lax.rsqrt(v + EPS), 0.0)


def _ref_conv_transpose(h, wt, s, p, op, k):
    # h: (N, H, W, CI) NHWC ; wt: torch ConvTranspose2d weight (CI, CO, k, k)
    # out[n, oy, ox, co] += h[n, iy, ix, ci] * wt[ci, co, ky, kx],  oy = iy*s - p + ky
    N, H, W, CI = h.shape
    CO = wt.shape[1]
    Hout = (H - 1) * s - 2 * p + k + op
    Wout = (W - 1) * s - 2 * p + k + op
    out = jnp.zeros((N, Hout, Wout, CO), h.dtype)
    for ky in range(k):
        iy_lo = max(0, math.ceil((p - ky) / s))
        iy_hi = min(H, (Hout - 1 - ky + p) // s + 1)
        if iy_hi <= iy_lo:
            continue
        oy_lo = iy_lo * s - p + ky
        for kx in range(k):
            ix_lo = max(0, math.ceil((p - kx) / s))
            ix_hi = min(W, (Wout - 1 - kx + p) // s + 1)
            if ix_hi <= ix_lo:
                continue
            ox_lo = ix_lo * s - p + kx
            contrib = jnp.einsum('nhwc,cd->nhwd',
                                 h[:, iy_lo:iy_hi, ix_lo:ix_hi, :],
                                 wt[:, :, ky, kx])
            ny, nx = iy_hi - iy_lo, ix_hi - ix_lo
            out = out.at[:, oy_lo:oy_lo + ny * s:s,
                            ox_lo:ox_lo + nx * s:s, :].add(contrib)
    return out


def ref_decoder(x_nchw, w1_t, wt_t, w2_t, *, k, s, p, op):
    x = jnp.transpose(x_nchw, (0, 2, 3, 1))
    h = _instnorm_relu_nhwc(jnp.einsum('nhwc,oc->nhwo', x, w1_t[:, :, 0, 0]))
    t = _instnorm_relu_nhwc(_ref_conv_transpose(h, wt_t, s, p, op, k))
    o = _instnorm_relu_nhwc(jnp.einsum('nhwc,oc->nhwo', t, w2_t[:, :, 0, 0]))
    return jnp.transpose(o, (0, 3, 1, 2))


# ---------------------------------------------------------------------------
if __name__ == "__main__":
    # Decoder(in_planes=16, out_planes=8, kernel_size=3, stride=2, padding=1,
    #         output_padding=1, bias=False)
    IN_PLANES, OUT_PLANES = 16, 8
    K, S, P, OP = 3, 2, 1, 1
    CMID = IN_PLANES // 4
    N, H, W = 2, 8, 8

    key = jax.random.PRNGKey(0)
    k1, k2, k3, kx = jax.random.split(key, 4)

    # Deterministic synthetic parameters (PyTorch weight layouts).
    w1_t = jax.random.normal(k1, (CMID, IN_PLANES, 1, 1), jnp.float32) * 0.1   # Conv2d (out,in,1,1)
    wt_t = jax.random.normal(k2, (CMID, CMID, K, K), jnp.float32) * 0.1        # ConvTranspose2d (in,out,kH,kW)
    w2_t = jax.random.normal(k3, (OUT_PLANES, CMID, 1, 1), jnp.float32) * 0.1  # Conv2d (out,in,1,1)
    x = jax.random.normal(kx, (N, IN_PLANES, H, W), jnp.float32)

    # Kernel-friendly (channels-first) weight forms.
    w1_mat = w1_t[:, :, 0, 0]                                      # (CMID, CIN)
    # Equivalent forward-conv weight per tap:
    #   wt_taps[dy*K+dx, co, ci] = Wt[ci, co, K-1-dy, K-1-dx]
    wt_taps = jnp.flip(wt_t, axis=(2, 3)).transpose(2, 3, 1, 0).reshape(
        K * K, CMID, CMID)
    w2_mat = w2_t[:, :, 0, 0]                                      # (COUT, CMID)

    out = decoder_forward(x, w1_mat, wt_taps, w2_mat, k=K, s=S, p=P, op=OP)
    out = jax.block_until_ready(out)

    ref = ref_decoder(x, w1_t, wt_t, w2_t, k=K, s=S, p=P, op=OP)

    HOUT = (H - 1) * S - 2 * P + K + OP
    WOUT = (W - 1) * S - 2 * P + K + OP
    assert out.shape == (N, OUT_PLANES, HOUT, WOUT), out.shape
    assert jnp.allclose(out, ref, atol=2e-2, rtol=2e-2), \
        f"max abs err {jnp.max(jnp.abs(out - ref))}"

    print("KERNEL_OK")
</pallas_src>

<mosaic_0001>
module attributes {stable_mosaic.version = 11 : i64} {
  func.func @_decoder_fused_kernel(%arg0: i32, %arg1: memref<1x16x64xf32, #tpu.memory_space<vmem>>, %arg2: memref<4x16xf32, #tpu.memory_space<vmem>>, %arg3: memref<9x4x4xf32, #tpu.memory_space<vmem>>, %arg4: memref<9x64x256xf32, #tpu.memory_space<vmem>>, %arg5: memref<8x4xf32, #tpu.memory_space<vmem>>, %arg6: memref<1x8x256xf32, #tpu.memory_space<vmem>>) attributes {dimension_semantics = [#tpu.dimension_semantics<parallel>], iteration_bounds = array<i64: 2>, scalar_prefetch = 0 : i64, scratch_operands = 0 : i64, tpu.core_type = #tpu.core_type<tc>, window_params = [{transform_indices = @transform_0, window_bounds = array<i64: 1, 16, 64>}, {pipeline_mode = #tpu.pipeline_mode<synchronous>, transform_indices = @transform_1, window_bounds = array<i64: 4, 16>}, {pipeline_mode = #tpu.pipeline_mode<synchronous>, transform_indices = @transform_2, window_bounds = array<i64: 9, 4, 4>}, {pipeline_mode = #tpu.pipeline_mode<synchronous>, transform_indices = @transform_3, window_bounds = array<i64: 9, 64, 256>}, {pipeline_mode = #tpu.pipeline_mode<synchronous>, transform_indices = @transform_4, window_bounds = array<i64: 8, 4>}, {transform_indices = @transform_5, window_bounds = array<i64: 1, 8, 256>}]} {
    %c0 = arith.constant 0 : index
    %c0_0 = arith.constant 0 : index
    %c0_1 = arith.constant 0 : index
    %0 = vector.load %arg1[%c0, %c0_0, %c0_1] : memref<1x16x64xf32, #tpu.memory_space<vmem>>, vector<1x16x64xf32>
    %1 = vector.shape_cast %0 : vector<1x16x64xf32> to vector<16x64xf32>
    %c0_2 = arith.constant 0 : index
    %c0_3 = arith.constant 0 : index
    %2 = vector.load %arg2[%c0_2, %c0_3] : memref<4x16xf32, #tpu.memory_space<vmem>>, vector<4x16xf32>
    %cst = arith.constant dense<0.000000e+00> : vector<4x64xf32>
    %3 = tpu.matmul %2, %1, %cst {dimension_numbers = #tpu.dot_dimension_numbers<[1], [0], [0], [1], [0, 0, 1, 1], [], []>} : vector<4x16xf32>, vector<16x64xf32>, vector<4x64xf32> -> vector<4x64xf32>
    %cst_4 = arith.constant dense<0.000000e+00> : vector<4xf32>
    %4 = vector.multi_reduction <add>, %3, %cst_4 [1] : vector<4x64xf32> to vector<4xf32>
    %5 = vector.shape_cast %4 : vector<4xf32> to vector<4x1xf32>
    %6 = arith.mulf %3, %3 : vector<4x64xf32>
    %cst_5 = arith.constant dense<0.000000e+00> : vector<4xf32>
    %7 = vector.multi_reduction <add>, %6, %cst_5 [1] : vector<4x64xf32> to vector<4xf32>
    %8 = vector.shape_cast %7 : vector<4xf32> to vector<4x1xf32>
    %cst_6 = arith.constant 1.562500e-02 : f32
    %9 = vector.broadcast %cst_6 : f32 to vector<4x1xf32>
    %10 = arith.mulf %5, %9 : vector<4x1xf32>
    %cst_7 = arith.constant 1.562500e-02 : f32
    %11 = vector.broadcast %cst_7 : f32 to vector<4x1xf32>
    %12 = arith.mulf %8, %11 : vector<4x1xf32>
    %13 = arith.mulf %10, %10 : vector<4x1xf32>
    %14 = arith.subf %12, %13 : vector<4x1xf32>
    %cst_8 = arith.constant 0.000000e+00 : f32
    %15 = vector.broadcast %cst_8 : f32 to vector<4x1xf32>
    %16 = arith.maximumf %14, %15 : vector<4x1xf32>
    %17 = vector.broadcast %10 : vector<4x1xf32> to vector<4x64xf32>
    %18 = arith.subf %3, %17 : vector<4x64xf32>
    %cst_9 = arith.constant 9.99999974E-6 : f32
    %19 = vector.broadcast %cst_9 : f32 to vector<4x1xf32>
    %20 = arith.addf %16, %19 : vector<4x1xf32>
    %21 = math.rsqrt %20 : vector<4x1xf32>
    %22 = vector.broadcast %21 : vector<4x1xf32> to vector<4x64xf32>
    %23 = arith.mulf %18, %22 : vector<4x64xf32>
    %cst_10 = arith.constant 0.000000e+00 : f32
    %24 = vector.broadcast %cst_10 : f32 to vector<4x64xf32>
    %25 = arith.maximumf %23, %24 : vector<4x64xf32>
    %c0_11 = arith.constant 0 : index
    %c0_12 = arith.constant 0 : index
    %c0_13 = arith.constant 0 : index
    %26 = vector.load %arg3[%c0_11, %c0_12, %c0_13] : memref<9x4x4xf32, #tpu.memory_space<vmem>>, vector<1x4x4xf32>
    %27 = vector.shape_cast %26 : vector<1x4x4xf32> to vector<4x4xf32>
    %cst_14 = arith.constant dense<0.000000e+00> : vector<4x64xf32>
    %28 = tpu.matmul %27, %25, %cst_14 {dimension_numbers = #tpu.dot_dimension_numbers<[1], [0], [0], [1], [0, 0, 1, 1], [], []>} : vector<4x4xf32>, vector<4x64xf32>, vector<4x64xf32> -> vector<4x64xf32>
    %c0_15 = arith.constant 0 : index
    %c0_16 = arith.constant 0 : index
    %c0_17 = arith.constant 0 : index
    %29 = vector.load %arg4[%c0_15, %c0_16, %c0_17] : memref<9x64x256xf32, #tpu.memory_space<vmem>>, vector<1x64x256xf32>
    %30 = vector.shape_cast %29 : vector<1x64x256xf32> to vector<64x256xf32>
    %cst_18 = arith.constant dense<0.000000e+00> : vector<4x256xf32>
    %31 = tpu.matmul %28, %30, %cst_18 {dimension_numbers = #tpu.dot_dimension_numbers<[1], [0], [0], [1], [0, 0, 1, 1], [], []>} : vector<4x64xf32>, vector<64x256xf32>, vector<4x256xf32> -> vector<4x256xf32>
    %c1 = arith.constant 1 : index
    %c0_19 = arith.constant 0 : index
    %c0_20 = arith.constant 0 : index
    %32 = vector.load %arg3[%c1, %c0_19, %c0_20] : memref<9x4x4xf32, #tpu.memory_space<vmem>>, vector<1x4x4xf32>
    %33 = vector.shape_cast %32 : vector<1x4x4xf32> to vector<4x4xf32>
    %cst_21 = arith.constant dense<0.000000e+00> : vector<4x64xf32>
    %34 = tpu.matmul %33, %25, %cst_21 {dimension_numbers = #tpu.dot_dimension_numbers<[1], [0], [0], [1], [0, 0, 1, 1], [], []>} : vector<4x4xf32>, vector<4x64xf32>, vector<4x64xf32> -> vector<4x64xf32>
    %c1_22 = arith.constant 1 : index
    %c0_23 = arith.constant 0 : index
    %c0_24 = arith.constant 0 : index
    %35 = vector.load %arg4[%c1_22, %c0_23, %c0_24] : memref<9x64x256xf32, #tpu.memory_space<vmem>>, vector<1x64x256xf32>
    %36 = vector.shape_cast %35 : vector<1x64x256xf32> to vector<64x256xf32>
    %cst_25 = arith.constant dense<0.000000e+00> : vector<4x256xf32>
    %37 = tpu.matmul %34, %36, %cst_25 {dimension_numbers = #tpu.dot_dimension_numbers<[1], [0], [0], [1], [0, 0, 1, 1], [], []>} : vector<4x64xf32>, vector<64x256xf32>, vector<4x256xf32> -> vector<4x256xf32>
    %38 = arith.addf %31, %37 : vector<4x256xf32>
    %c2 = arith.constant 2 : index
    %c0_26 = arith.constant 0 : index
    %c0_27 = arith.constant 0 : index
    %39 = vector.load %arg3[%c2, %c0_26, %c0_27] : memref<9x4x4xf32, #tpu.memory_space<vmem>>, vector<1x4x4xf32>
    %40 = vector.shape_cast %39 : vector<1x4x4xf32> to vector<4x4xf32>
    %cst_28 = arith.constant dense<0.000000e+00> : vector<4x64xf32>
    %41 = tpu.matmul %40, %25, %cst_28 {dimension_numbers = #tpu.dot_dimension_numbers<[1], [0], [0], [1], [0, 0, 1, 1], [], []>} : vector<4x4xf32>, vector<4x64xf32>, vector<4x64xf32> -> vector<4x64xf32>
    %c2_29 = arith.constant 2 : index
    %c0_30 = arith.constant 0 : index
    %c0_31 = arith.constant 0 : index
    %42 = vector.load %arg4[%c2_29, %c0_30, %c0_31] : memref<9x64x256xf32, #tpu.memory_space<vmem>>, vector<1x64x256xf32>
    %43 = vector.shape_cast %42 : vector<1x64x256xf32> to vector<64x256xf32>
    %cst_32 = arith.constant dense<0.000000e+00> : vector<4x256xf32>
    %44 = tpu.matmul %41, %43, %cst_32 {dimension_numbers = #tpu.dot_dimension_numbers<[1], [0], [0], [1], [0, 0, 1, 1], [], []>} : vector<4x64xf32>, vector<64x256xf32>, vector<4x256xf32> -> vector<4x256xf32>
    %45 = arith.addf %38, %44 : vector<4x256xf32>
    %c3 = arith.constant 3 : index
    %c0_33 = arith.constant 0 : index
    %c0_34 = arith.constant 0 : index
    %46 = vector.load %arg3[%c3, %c0_33, %c0_34] : memref<9x4x4xf32, #tpu.memory_space<vmem>>, vector<1x4x4xf32>
    %47 = vector.shape_cast %46 : vector<1x4x4xf32> to vector<4x4xf32>
    %cst_35 = arith.constant dense<0.000000e+00> : vector<4x64xf32>
    %48 = tpu.matmul %47, %25, %cst_35 {dimension_numbers = #tpu.dot_dimension_numbers<[1], [0], [0], [1], [0, 0, 1, 1], [], []>} : vector<4x4xf32>, vector<4x64xf32>, vector<4x64xf32> -> vector<4x64xf32>
    %c3_36 = arith.constant 3 : index
    %c0_37 = arith.constant 0 : index
    %c0_38 = arith.constant 0 : index
    %49 = vector.load %arg4[%c3_36, %c0_37, %c0_38] : memref<9x64x256xf32, #tpu.memory_space<vmem>>, vector<1x64x256xf32>
    %50 = vector.shape_cast %49 : vector<1x64x256xf32> to vector<64x256xf32>
    %cst_39 = arith.constant dense<0.000000e+00> : vector<4x256xf32>
    %51 = tpu.matmul %48, %50, %cst_39 {dimension_numbers = #tpu.dot_dimension_numbers<[1], [0], [0], [1], [0, 0, 1, 1], [], []>} : vector<4x64xf32>, vector<64x256xf32>, vector<4x256xf32> -> vector<4x256xf32>
    %52 = arith.addf %45, %51 : vector<4x256xf32>
    %c4 = arith.constant 4 : index
    %c0_40 = arith.constant 0 : index
    %c0_41 = arith.constant 0 : index
    %53 = vector.load %arg3[%c4, %c0_40, %c0_41] : memref<9x4x4xf32, #tpu.memory_space<vmem>>, vector<1x4x4xf32>
    %54 = vector.shape_cast %53 : vector<1x4x4xf32> to vector<4x4xf32>
    %cst_42 = arith.constant dense<0.000000e+00> : vector<4x64xf32>
    %55 = tpu.matmul %54, %25, %cst_42 {dimension_numbers = #tpu.dot_dimension_numbers<[1], [0], [0], [1], [0, 0, 1, 1], [], []>} : vector<4x4xf32>, vector<4x64xf32>, vector<4x64xf32> -> vector<4x64xf32>
    %c4_43 = arith.constant 4 : index
    %c0_44 = arith.constant 0 : index
    %c0_45 = arith.constant 0 : index
    %56 = vector.load %arg4[%c4_43, %c0_44, %c0_45] : memref<9x64x256xf32, #tpu.memory_space<vmem>>, vector<1x64x256xf32>
    %57 = vector.shape_cast %56 : vector<1x64x256xf32> to vector<64x256xf32>
    %cst_46 = arith.constant dense<0.000000e+00> : vector<4x256xf32>
    %58 = tpu.matmul %55, %57, %cst_46 {dimension_numbers = #tpu.dot_dimension_numbers<[1], [0], [0], [1], [0, 0, 1, 1], [], []>} : vector<4x64xf32>, vector<64x256xf32>, vector<4x256xf32> -> vector<4x256xf32>
    %59 = arith.addf %52, %58 : vector<4x256xf32>
    %c5 = arith.constant 5 : index
    %c0_47 = arith.constant 0 : index
    %c0_48 = arith.constant 0 : index
    %60 = vector.load %arg3[%c5, %c0_47, %c0_48] : memref<9x4x4xf32, #tpu.memory_space<vmem>>, vector<1x4x4xf32>
    %61 = vector.shape_cast %60 : vector<1x4x4xf32> to vector<4x4xf32>
    %cst_49 = arith.constant dense<0.000000e+00> : vector<4x64xf32>
    %62 = tpu.matmul %61, %25, %cst_49 {dimension_numbers = #tpu.dot_dimension_numbers<[1], [0], [0], [1], [0, 0, 1, 1], [], []>} : vector<4x4xf32>, vector<4x64xf32>, vector<4x64xf32> -> vector<4x64xf32>
    %c5_50 = arith.constant 5 : index
    %c0_51 = arith.constant 0 : index
    %c0_52 = arith.constant 0 : index
    %63 = vector.load %arg4[%c5_50, %c0_51, %c0_52] : memref<9x64x256xf32, #tpu.memory_space<vmem>>, vector<1x64x256xf32>
    %64 = vector.shape_cast %63 : vector<1x64x256xf32> to vector<64x256xf32>
    %cst_53 = arith.constant dense<0.000000e+00> : vector<4x256xf32>
    %65 = tpu.matmul %62, %64, %cst_53 {dimension_numbers = #tpu.dot_dimension_numbers<[1], [0], [0], [1], [0, 0, 1, 1], [], []>} : vector<4x64xf32>, vector<64x256xf32>, vector<4x256xf32> -> vector<4x256xf32>
    %66 = arith.addf %59, %65 : vector<4x256xf32>
    %c6 = arith.constant 6 : index
    %c0_54 = arith.constant 0 : index
    %c0_55 = arith.constant 0 : index
    %67 = vector.load %arg3[%c6, %c0_54, %c0_55] : memref<9x4x4xf32, #tpu.memory_space<vmem>>, vector<1x4x4xf32>
    %68 = vector.shape_cast %67 : vector<1x4x4xf32> to vector<4x4xf32>
    %cst_56 = arith.constant dense<0.000000e+00> : vector<4x64xf32>
    %69 = tpu.matmul %68, %25, %cst_56 {dimension_numbers = #tpu.dot_dimension_numbers<[1], [0], [0], [1], [0, 0, 1, 1], [], []>} : vector<4x4xf32>, vector<4x64xf32>, vector<4x64xf32> -> vector<4x64xf32>
    %c6_57 = arith.constant 6 : index
    %c0_58 = arith.constant 0 : index
    %c0_59 = arith.constant 0 : index
    %70 = vector.load %arg4[%c6_57, %c0_58, %c0_59] : memref<9x64x256xf32, #tpu.memory_space<vmem>>, vector<1x64x256xf32>
    %71 = vector.shape_cast %70 : vector<1x64x256xf32> to vector<64x256xf32>
    %cst_60 = arith.constant dense<0.000000e+00> : vector<4x256xf32>
    %72 = tpu.matmul %69, %71, %cst_60 {dimension_numbers = #tpu.dot_dimension_numbers<[1], [0], [0], [1], [0, 0, 1, 1], [], []>} : vector<4x64xf32>, vector<64x256xf32>, vector<4x256xf32> -> vector<4x256xf32>
    %73 = arith.addf %66, %72 : vector<4x256xf32>
    %c7 = arith.constant 7 : index
    %c0_61 = arith.constant 0 : index
    %c0_62 = arith.constant 0 : index
    %74 = vector.load %arg3[%c7, %c0_61, %c0_62] : memref<9x4x4xf32, #tpu.memory_space<vmem>>, vector<1x4x4xf32>
    %75 = vector.shape_cast %74 : vector<1x4x4xf32> to vector<4x4xf32>
    %cst_63 = arith.constant dense<0.000000e+00> : vector<4x64xf32>
    %76 = tpu.matmul %75, %25, %cst_63 {dimension_numbers = #tpu.dot_dimension_numbers<[1], [0], [0], [1], [0, 0, 1, 1], [], []>} : vector<4x4xf32>, vector<4x64xf32>, vector<4x64xf32> -> vector<4x64xf32>
    %c7_64 = arith.constant 7 : index
    %c0_65 = arith.constant 0 : index
    %c0_66 = arith.constant 0 : index
    %77 = vector.load %arg4[%c7_64, %c0_65, %c0_66] : memref<9x64x256xf32, #tpu.memory_space<vmem>>, vector<1x64x256xf32>
    %78 = vector.shape_cast %77 : vector<1x64x256xf32> to vector<64x256xf32>
    %cst_67 = arith.constant dense<0.000000e+00> : vector<4x256xf32>
    %79 = tpu.matmul %76, %78, %cst_67 {dimension_numbers = #tpu.dot_dimension_numbers<[1], [0], [0], [1], [0, 0, 1, 1], [], []>} : vector<4x64xf32>, vector<64x256xf32>, vector<4x256xf32> -> vector<4x256xf32>
    %80 = arith.addf %73, %79 : vector<4x256xf32>
    %c8 = arith.constant 8 : index
    %c0_68 = arith.constant 0 : index
    %c0_69 = arith.constant 0 : index
    %81 = vector.load %arg3[%c8, %c0_68, %c0_69] : memref<9x4x4xf32, #tpu.memory_space<vmem>>, vector<1x4x4xf32>
    %82 = vector.shape_cast %81 : vector<1x4x4xf32> to vector<4x4xf32>
    %cst_70 = arith.constant dense<0.000000e+00> : vector<4x64xf32>
    %83 = tpu.matmul %82, %25, %cst_70 {dimension_numbers = #tpu.dot_dimension_numbers<[1], [0], [0], [1], [0, 0, 1, 1], [], []>} : vector<4x4xf32>, vector<4x64xf32>, vector<4x64xf32> -> vector<4x64xf32>
    %c8_71 = arith.constant 8 : index
    %c0_72 = arith.constant 0 : index
    %c0_73 = arith.constant 0 : index
    %84 = vector.load %arg4[%c8_71, %c0_72, %c0_73] : memref<9x64x256xf32, #tpu.memory_space<vmem>>, vector<1x64x256xf32>
    %85 = vector.shape_cast %84 : vector<1x64x256xf32> to vector<64x256xf32>
    %cst_74 = arith.constant dense<0.000000e+00> : vector<4x256xf32>
    %86 = tpu.matmul %83, %85, %cst_74 {dimension_numbers = #tpu.dot_dimension_numbers<[1], [0], [0], [1], [0, 0, 1, 1], [], []>} : vector<4x64xf32>, vector<64x256xf32>, vector<4x256xf32> -> vector<4x256xf32>
    %87 = arith.addf %80, %86 : vector<4x256xf32>
    %cst_75 = arith.constant dense<0.000000e+00> : vector<4xf32>
    %88 = vector.multi_reduction <add>, %87, %cst_75 [1] : vector<4x256xf32> to vector<4xf32>
    %89 = vector.shape_cast %88 : vector<4xf32> to vector<4x1xf32>
    %90 = arith.mulf %87, %87 : vector<4x256xf32>
    %cst_76 = arith.constant dense<0.000000e+00> : vector<4xf32>
    %91 = vector.multi_reduction <add>, %90, %cst_76 [1] : vector<4x256xf32> to vector<4xf32>
    %92 = vector.shape_cast %91 : vector<4xf32> to vector<4x1xf32>
    %cst_77 = arith.constant 3.906250e-03 : f32
    %93 = vector.broadcast %cst_77 : f32 to vector<4x1xf32>
    %94 = arith.mulf %89, %93 : vector<4x1xf32>
    %cst_78 = arith.constant 3.906250e-03 : f32
    %95 = vector.broadcast %cst_78 : f32 to vector<4x1xf32>
    %96 = arith.mulf %92, %95 : vector<4x1xf32>
    %97 = arith.mulf %94, %94 : vector<4x1xf32>
    %98 = arith.subf %96, %97 : vector<4x1xf32>
    %cst_79 = arith.constant 0.000000e+00 : f32
    %99 = vector.broadcast %cst_79 : f32 to vector<4x1xf32>
    %100 = arith.maximumf %98, %99 : vector<4x1xf32>
    %101 = vector.broadcast %94 : vector<4x1xf32> to vector<4x256xf32>
    %102 = arith.subf %87, %101 : vector<4x256xf32>
    %cst_80 = arith.constant 9.99999974E-6 : f32
    %103 = vector.broadcast %cst_80 : f32 to vector<4x1xf32>
    %104 = arith.addf %100, %103 : vector<4x1xf32>
    %105 = math.rsqrt %104 : vector<4x1xf32>
    %106 = vector.broadcast %105 : vector<4x1xf32> to vector<4x256xf32>
    %107 = arith.mulf %102, %106 : vector<4x256xf32>
    %cst_81 = arith.constant 0.000000e+00 : f32
    %108 = vector.broadcast %cst_81 : f32 to vector<4x256xf32>
    %109 = arith.maximumf %107, %108 : vector<4x256xf32>
    %c0_82 = arith.constant 0 : index
    %c0_83 = arith.constant 0 : index
    %110 = vector.load %arg5[%c0_82, %c0_83] : memref<8x4xf32, #tpu.memory_space<vmem>>, vector<8x4xf32>
    %cst_84 = arith.constant dense<0.000000e+00> : vector<8x256xf32>
    %111 = tpu.matmul %110, %109, %cst_84 {dimension_numbers = #tpu.dot_dimension_numbers<[1], [0], [0], [1], [0, 0, 1, 1], [], []>} : vector<8x4xf32>, vector<4x256xf32>, vector<8x256xf32> -> vector<8x256xf32>
    %cst_85 = arith.constant dense<0.000000e+00> : vector<8xf32>
    %112 = vector.multi_reduction <add>, %111, %cst_85 [1] : vector<8x256xf32> to vector<8xf32>
    %113 = vector.shape_cast %112 : vector<8xf32> to vector<8x1xf32>
    %114 = arith.mulf %111, %111 : vector<8x256xf32>
    %cst_86 = arith.constant dense<0.000000e+00> : vector<8xf32>
    %115 = vector.multi_reduction <add>, %114, %cst_86 [1] : vector<8x256xf32> to vector<8xf32>
    %116 = vector.shape_cast %115 : vector<8xf32> to vector<8x1xf32>
    %cst_87 = arith.constant 3.906250e-03 : f32
    %117 = vector.broadcast %cst_87 : f32 to vector<8x1xf32>
    %118 = arith.mulf %113, %117 : vector<8x1xf32>
    %cst_88 = arith.constant 3.906250e-03 : f32
    %119 = vector.broadcast %cst_88 : f32 to vector<8x1xf32>
    %120 = arith.mulf %116, %119 : vector<8x1xf32>
    %121 = arith.mulf %118, %118 : vector<8x1xf32>
    %122 = arith.subf %120, %121 : vector<8x1xf32>
    %cst_89 = arith.constant 0.000000e+00 : f32
    %123 = vector.broadcast %cst_89 : f32 to vector<8x1xf32>
    %124 = arith.maximumf %122, %123 : vector<8x1xf32>
    %125 = vector.broadcast %118 : vector<8x1xf32> to vector<8x256xf32>
    %126 = arith.subf %111, %125 : vector<8x256xf32>
    %cst_90 = arith.constant 9.99999974E-6 : f32
    %127 = vector.broadcast %cst_90 : f32 to vector<8x1xf32>
    %128 = arith.addf %124, %127 : vector<8x1xf32>
    %129 = math.rsqrt %128 : vector<8x1xf32>
    %130 = vector.broadcast %129 : vector<8x1xf32> to vector<8x256xf32>
    %131 = arith.mulf %126, %130 : vector<8x256xf32>
    %cst_91 = arith.constant 0.000000e+00 : f32
    %132 = vector.broadcast %cst_91 : f32 to vector<8x256xf32>
    %133 = arith.maximumf %131, %132 : vector<8x256xf32>
    %c0_92 = arith.constant 0 : index
    %c0_93 = arith.constant 0 : index
    %c0_94 = arith.constant 0 : index
    %134 = vector.load %arg6[%c0_92, %c0_93, %c0_94] : memref<1x8x256xf32, #tpu.memory_space<vmem>>, vector<1x8x256xf32>
    %135 = vector.shape_cast %134 : vector<1x8x256xf32> to vector<8x256xf32>
    %136 = vector.shape_cast %133 : vector<8x256xf32> to vector<1x8x256xf32>
    tpu.vector_store %arg6[%c0_92, %c0_93, %c0_94], %136 {strides = array<i32>} : memref<1x8x256xf32, #tpu.memory_space<vmem>>, vector<1x8x256xf32>,
    return
  }
  func.func @transform_0(%arg0: i32) -> (i32, i32, i32) {
    %c0_i32 = arith.constant 0 : i32
    %c0_i32_0 = arith.constant 0 : i32
    %c0_i32_1 = arith.constant 0 : i32
    return %arg0, %c0_i32, %c0_i32_0 : i32, i32, i32
  }
  func.func @transform_1(%arg0: i32) -> (i32, i32) {
    %c0_i32 = arith.constant 0 : i32
    %c0_i32_0 = arith.constant 0 : i32
    %c0_i32_1 = arith.constant 0 : i32
    return %c0_i32, %c0_i32_0 : i32, i32
  }
  func.func @transform_2(%arg0: i32) -> (i32, i32, i32) {
    %c0_i32 = arith.constant 0 : i32
    %c0_i32_0 = arith.constant 0 : i32
    %c0_i32_1 = arith.constant 0 : i32
    %c0_i32_2 = arith.constant 0 : i32
    return %c0_i32, %c0_i32_0, %c0_i32_1 : i32, i32, i32
  }
  func.func @transform_3(%arg0: i32) -> (i32, i32, i32) {
    %c0_i32 = arith.constant 0 : i32
    %c0_i32_0 = arith.constant 0 : i32
    %c0_i32_1 = arith.constant 0 : i32
    %c0_i32_2 = arith.constant 0 : i32
    return %c0_i32, %c0_i32_0, %c0_i32_1 : i32, i32, i32
  }
  func.func @transform_4(%arg0: i32) -> (i32, i32) {
    %c0_i32 = arith.constant 0 : i32
    %c0_i32_0 = arith.constant 0 : i32
    %c0_i32_1 = arith.constant 0 : i32
    return %c0_i32, %c0_i32_0 : i32, i32
  }
  func.func @transform_5(%arg0: i32) -> (i32, i32, i32) {
    %c0_i32 = arith.constant 0 : i32
    %c0_i32_0 = arith.constant 0 : i32
    %c0_i32_1 = arith.constant 0 : i32
    return %arg0, %c0_i32, %c0_i32_0 : i32, i32, i32
  }
}

</mosaic_0001>

<llo_original>
// kernel: tpu_custom_call.1
$region0: #{tpu_custom_call.1}
  #allocation0 [shape = 'u32[]', space=smem, size = 0x4, offset = 0x4, fixed_abs, tag = 'smem constant byte address 0x4 - core index']
  #allocation1 [shape = 'u32[144,128]{1,0:T(1,128)}', space=vmem, size = 0x12000, scoped, tag = 'internal scratch']
  %s0 = inlined_call_operand.vmem [shape: f32[2,16,64], index: 0, kind: input, shape index: {}]
  %s1 = inlined_call_operand.vmem [shape: f32[4,16], index: 1, kind: input, shape index: {}]
  %s2 = inlined_call_operand.vmem [shape: f32[9,4,4], index: 2, kind: input, shape index: {}]
  %s3 = inlined_call_operand.hbm [shape: f32[9,64,256], index: 3, kind: input, shape index: {}]
  %s4 = inlined_call_operand.vmem [shape: f32[8,4], index: 4, kind: input, shape index: {}]
  %s5 = inlined_call_operand.hbm [shape: f32[2,8,256], index: 5, kind: output, shape index: {}]
  %s6 = sld [smem:[#allocation0]]
  $region57: #{tpu_custom_call.1} parent=0
    _
  %s8 = ssub.s32 1, %s6
  %s9 = scalar_select 0, %s8, %s6
  $region1: #{tpu_custom_call.1} parent=0
    #allocation2 [shape = 'u8[589824]{0}', space=vmem, size = 0x90000, scoped, tag = 'input window, operand 3, single buffered']
    #allocation3 [shape = 's32[2]{0}', space=sflag, size = 0x8, scoped, tag = 'scoped memory for tpu_custom_call.1']
    #allocation4 [shape = 's32[2]{0}', space=sflag, size = 0x8, scoped, tag = 'scoped memory for tpu_custom_call.1']
    #allocation5 [shape = 'u8[16384]{0}', space=vmem, size = 0x4000, scoped, tag = 'output window, operand 0']
    %10 = vsyncpa [#allocation3], 0
    %11 = vsyncpa [#allocation4], 0
    %s12 = scalar_lea.sflag [#allocation4], 1
    %13 = vsyncpa %s12, 0
    loop: start=0, step=1, limit=4
    $region2: #{tpu_custom_call.1} parent=1 // loop_pre_header
      _
    $region3: #{tpu_custom_call.1} parent=1 // loop_header
      %s15 = sphi 0, %s19
      %p16 = scmp.ge.s32.totalorder %s15, 4
      %s25 = sphi 0, %s27
      %s28 = sphi 0, %s25
      %s29 = sphi 0, %s28
      %s45 = sphi 0, %s29
      %s49 = sphi 0, %s49
      %s51 = sphi 0, %s49
      %s52 = sphi 0, %s51
      %s66 = sphi 0, %s52
      %s70 = sphi 0, %s70
      %s72 = sphi 0, %s70
      %s73 = sphi 0, %s72
      %s87 = sphi 0, %s73
      %s91 = sphi 0, %s91
      %s93 = sphi 0, %s91
      %s94 = sphi 0, %s93
      %s108 = sphi 0, %s94
      %s112 = sphi 0, %s112
      %s114 = sphi 0, %s112
      %s115 = sphi 0, %s114
      %s129 = sphi 0, %s115
      %s135 = sphi 0, %s137
      %s138 = sphi 0, %s135
      %s139 = sphi 0, %s138
      %s155 = sphi 0, %s139
    $region4: #{tpu_custom_call.1} parent=1 // loop_header_branch
      %18 = sbr.rel (%p16) target = $region8
    $region5: #{tpu_custom_call.1} parent=1 // loop_body
      %s20 = ssub.s32 %s15, 1
      %s21 = ssub.s32 %s15, 2
      %s22 = sadd.s32 %s15, 1
      %s23 = ssub.s32 %s15, %s22
      %p24 = scmp.eq.s32.totalorder %s23, 0
      %s26 = sadd.s32 %s25, 1
      %s27 = scalar_select %p24, %s25, %s26
      %p30 = pneg %p24
      %p31 = scmp.eq.s32.totalorder %s15, 1
      %p32 = por %p30, %p31
      %p33 = scmp.ne.s32.totalorder %s25, %s28
      %p34 = scmp.eq.s32.totalorder %s15, 0
      %p35 = por %p33, %p34
      %p36 = scmp.ne.s32.totalorder %s25, %s28
      %p37 = scmp.eq.s32.totalorder %s20, 1
      %p38 = por %p36, %p37
      %p39 = scmp.ne.s32.totalorder %s28, %s29
      %p40 = scmp.eq.s32.totalorder %s20, 0
      %p41 = por %p39, %p40
      %p42 = scmp.ne.s32.totalorder %s28, %s29
      %p43 = scmp.eq.s32.totalorder %s21, 1
      %p44 = por %p42, %p43
      %p46 = scmp.ne.s32.totalorder %s29, %s45
      %p47 = scmp.eq.s32.totalorder %s21, 0
      %p48 = por %p46, %p47
      %s50 = sadd.s32 %s49, 1
      %p53 = scmp.eq.s32.totalorder %s15, 1
      %p54 = scmp.ne.s32.totalorder %s49, %s51
      %p55 = scmp.eq.s32.totalorder %s15, 0
      %p56 = por %p54, %p55
      %p57 = scmp.ne.s32.totalorder %s49, %s51
      %p58 = scmp.eq.s32.totalorder %s20, 1
      %p59 = por %p57, %p58
      %p60 = scmp.ne.s32.totalorder %s51, %s52
      %p61 = scmp.eq.s32.totalorder %s20, 0
      %p62 = por %p60, %p61
      %p63 = scmp.ne.s32.totalorder %s51, %s52
      %p64 = scmp.eq.s32.totalorder %s21, 1
      %p65 = por %p63, %p64
      %p67 = scmp.ne.s32.totalorder %s52, %s66
      %p68 = scmp.eq.s32.totalorder %s21, 0
      %p69 = por %p67, %p68
      %s71 = sadd.s32 %s70, 1
      %p74 = scmp.eq.s32.totalorder %s15, 1
      %p75 = scmp.ne.s32.totalorder %s70, %s72
      %p76 = scmp.eq.s32.totalorder %s15, 0
      %p77 = por %p75, %p76
      %p78 = scmp.ne.s32.totalorder %s70, %s72
      %p79 = scmp.eq.s32.totalorder %s20, 1
      %p80 = por %p78, %p79
      %p81 = scmp.ne.s32.totalorder %s72, %s73
      %p82 = scmp.eq.s32.totalorder %s20, 0
      %p83 = por %p81, %p82
      %p84 = scmp.ne.s32.totalorder %s72, %s73
      %p85 = scmp.eq.s32.totalorder %s21, 1
      %p86 = por %p84, %p85
      %p88 = scmp.ne.s32.totalorder %s73, %s87
      %p89 = scmp.eq.s32.totalorder %s21, 0
      %p90 = por %p88, %p89
      %s92 = sadd.s32 %s91, 1
      %p95 = scmp.eq.s32.totalorder %s15, 1
      %p96 = scmp.ne.s32.totalorder %s91, %s93
      %p97 = scmp.eq.s32.totalorder %s15, 0
      %p98 = por %p96, %p97
      %p99 = scmp.ne.s32.totalorder %s91, %s93
      %p100 = scmp.eq.s32.totalorder %s20, 1
      %p101 = por %p99, %p100
      %p102 = scmp.ne.s32.totalorder %s93, %s94
      %p103 = scmp.eq.s32.totalorder %s20, 0
      %p104 = por %p102, %p103
      %p105 = scmp.ne.s32.totalorder %s93, %s94
      %p106 = scmp.eq.s32.totalorder %s21, 1
      %p107 = por %p105, %p106
      %p109 = scmp.ne.s32.totalorder %s94, %s108
      %p110 = scmp.eq.s32.totalorder %s21, 0
      %p111 = por %p109, %p110
      %s113 = sadd.s32 %s112, 1
      %p116 = scmp.eq.s32.totalorder %s15, 1
      %p117 = scmp.ne.s32.totalorder %s112, %s114
      %p118 = scmp.eq.s32.totalorder %s15, 0
      %p119 = por %p117, %p118
      %p120 = scmp.ne.s32.totalorder %s112, %s114
      %p121 = scmp.eq.s32.totalorder %s20, 1
      %p122 = por %p120, %p121
      %p123 = scmp.ne.s32.totalorder %s114, %s115
      %p124 = scmp.eq.s32.totalorder %s20, 0
      %p125 = por %p123, %p124
      %p126 = scmp.ne.s32.totalorder %s114, %s115
      %p127 = scmp.eq.s32.totalorder %s21, 1
      %p128 = por %p126, %p127
      %p130 = scmp.ne.s32.totalorder %s115, %s129
      %p131 = scmp.eq.s32.totalorder %s21, 0
      %p132 = por %p130, %p131
      %s133 = ssub.s32 %s15, %s22
      %p134 = scmp.eq.s32.totalorder %s133, 0
      %s136 = sadd.s32 %s135, 1
      %s137 = scalar_select %p134, %s135, %s136
      %p140 = pneg %p134
      %p141 = scmp.eq.s32.totalorder %s15, 1
      %p142 = por %p140, %p141
      %p143 = scmp.ne.s32.totalorder %s135, %s138
      %p144 = scmp.eq.s32.totalorder %s15, 0
      %p145 = por %p143, %p144
      %p146 = scmp.ne.s32.totalorder %s135, %s138
      %p147 = scmp.eq.s32.totalorder %s20, 1
      %p148 = por %p146, %p147
      %p149 = scmp.ne.s32.totalorder %s138, %s139
      %p150 = scmp.eq.s32.totalorder %s20, 0
      %p151 = por %p149, %p150
      %p152 = scmp.ne.s32.totalorder %s138, %s139
      %p153 = scmp.eq.s32.totalorder %s21, 1
      %p154 = por %p152, %p153
      %p156 = scmp.ne.s32.totalorder %s139, %s155
      %p157 = scmp.eq.s32.totalorder %s21, 0
      %p158 = por %p156, %p157
      %p159 = scmp.le.s32.totalorder 1, %s15
      %p160 = scmp.lt.s32.totalorder %s15, 3
      %p161 = pnand %p159, %p160
      %p162 = pneg %p161
      // Predicated region
      $region9: #{tpu_custom_call.1} parent=5 // pred_check
        _
      $region10: #{tpu_custom_call.1} parent=5 // pred_check_branch
        %164 = sbr.rel (%p161) target = $region12
      $region11: #{tpu_custom_call.1} parent=5 // pred_region
        %s165 = ssub.s32 %s15, 1
        // Predicated region
        $region13: #{tpu_custom_call.1} parent=11 // pred_check
          %p166 = pneg %p62
        $region14: #{tpu_custom_call.1} parent=11 // pred_check_branch
          %168 = sbr.rel (%p166) target = $region16
        $region15: #{tpu_custom_call.1} parent=11 // pred_region
          _
        $region16: #{tpu_custom_call.1} parent=11 // pred_fallthru
          _
        // Predicated region
        $region17: #{tpu_custom_call.1} parent=11 // pred_check
          %p169 = pneg %p83
        $region18: #{tpu_custom_call.1} parent=11 // pred_check_branch
          %171 = sbr.rel (%p169) target = $region20
        $region19: #{tpu_custom_call.1} parent=11 // pred_region
          _
        $region20: #{tpu_custom_call.1} parent=11 // pred_fallthru
          _
        // Predicated region
        $region21: #{tpu_custom_call.1} parent=11 // pred_check
          %p172 = pneg %p104
        $region22: #{tpu_custom_call.1} parent=11 // pred_check_branch
          %174 = sbr.rel (%p172) target = $region24
        $region23: #{tpu_custom_call.1} parent=11 // pred_region
          %s176 = ssub.s32 18432, 18432
          %177 = vsyncadd [#allocation3], %s176
          %s178 = sshll.u32 [#allocation2], 4
          %s179 = int_to_ptr.vmem [resolvable:$true] %s178
          %184 = dma.hbm_to_vmem [thread:$0]  %s3, 18432, %s179, [#allocation3], 256, 256, 16
        $region24: #{tpu_custom_call.1} parent=11 // pred_fallthru
          _
        // Predicated region
        $region25: #{tpu_custom_call.1} parent=11 // pred_check
          %p185 = pneg %p125
        $region26: #{tpu_custom_call.1} parent=11 // pred_check_branch
          %187 = sbr.rel (%p185) target = $region28
        $region27: #{tpu_custom_call.1} parent=11 // pred_region
          _
        $region28: #{tpu_custom_call.1} parent=11 // pred_fallthru
          _
      $region12: #{tpu_custom_call.1} parent=5 // pred_fallthru
        _
      %p188 = scmp.lt.s32.totalorder %s15, 2
      // Predicated region
      $region29: #{tpu_custom_call.1} parent=5 // pred_check
        %p189 = pneg %p188
      $region30: #{tpu_custom_call.1} parent=5 // pred_check_branch
        %191 = sbr.rel (%p189) target = $region32
      $region31: #{tpu_custom_call.1} parent=5 // pred_region
        // Predicated region
        $region33: #{tpu_custom_call.1} parent=31 // pred_check
          %p192 = pneg %p35
        $region34: #{tpu_custom_call.1} parent=31 // pred_check_branch
          %194 = sbr.rel (%p192) target = $region36
        $region35: #{tpu_custom_call.1} parent=31 // pred_region
          %p195 = scmp.lt.s32.totalorder %s15, 1
          %s196 = scalar_select %p195, %s15, 1
          %s197 = smul.addr %s196, 2
          %s198 = smul.addr %s197, 8
          %s199 = scalar_lea.vmem %s0, %s198
        $region36: #{tpu_custom_call.1} parent=31 // pred_fallthru
          _
      $region32: #{tpu_custom_call.1} parent=5 // pred_fallthru
        _
      %p200 = scmp.le.s32.totalorder 1, %s15
      %p201 = scmp.lt.s32.totalorder %s15, 3
      %p202 = pnand %p200, %p201
      %p203 = pneg %p202
      // Predicated region
      $region37: #{tpu_custom_call.1} parent=5 // pred_check
        _
      $region38: #{tpu_custom_call.1} parent=5 // pred_check_branch
        %205 = sbr.rel (%p202) target = $region40
      $region39: #{tpu_custom_call.1} parent=5 // pred_region
        %s206 = ssub.s32 %s15, 1
        // Predicated region
        $region41: #{tpu_custom_call.1} parent=39 // pred_check
          %p207 = pneg %p104
        $region42: #{tpu_custom_call.1} parent=39 // pred_check_branch
          %209 = sbr.rel (%p207) target = $region44
        $region43: #{tpu_custom_call.1} parent=39 // pred_region
          %210 = dma.done [#allocation3], 18432
        $region44: #{tpu_custom_call.1} parent=39 // pred_fallthru
          _
        %p211 = scmp.lt.s32.totalorder %s20, 1
        %s212 = scalar_select %p211, %s20, 1
        %s213 = smul.addr %s212, 2
        %s214 = smul.addr %s213, 8
        %s215 = scalar_lea.vmem %s0, %s214
        %p216 = pneg %p41
        %p217 = pneg %p38
        %p218 = pneg %p62
        %p219 = pneg %p59
        %p220 = pneg %p83
        %p221 = pneg %p80
        %p222 = pneg %p104
        %p223 = pneg %p101
        %p224 = pneg %p125
        %p225 = pneg %p122
        %p226 = pneg %p151
        %p227 = pneg %p148
        %s228 = sand.u32 %s138, 1
        %s229 = scalar_lea.sflag [#allocation4], %s228
        %s230 = sand.u32 %s138, 1
        %s231 = smul.addr %s230, 16
        %s232 = scalar_lea.vmem [#allocation5], %s231
        %p233 = scmp.lt.s32.totalorder %s20, 1
        %s234 = scalar_select %p233, %s20, 1
        %s235 = smul.addr %s234, 2
        %s236 = smul.addr %s235, 8
        %s237 = scalar_lea.vmem %s0, %s236
        %v238 = vld [vmem:[%s237] sm:$0xff]
        %v239 = vld [vmem:[%s237 + $0x8] sm:$0xff]
        %v240 = vld [vmem:[%s1] sm:$0xf]
        %vm241 = vcmask 130048
        %v243 = vsel %vm241, %v240, 0
        %245 = vmatprep.subr.mxu0 0.0
        %246 = vmatpush1.msra.mxu0 %v238
        %247 = vmatprep.subr.mxu0 0.0
        %248 = vmatpush1.msra.mxu0 %v239
        %249 = vmatprep.subr.mxu0 0.0
        %250 = vmatpush1.msra.mxu0 0.0
        %251 = vmatprep.subr.mxu0 0.0
        %252 = vmatpush1.msra.mxu0 0.0
        %253 = vmatprep.subr.mxu0 0.0
        %254 = vmatpush1.msra.mxu0 0.0
        %255 = vmatprep.subr.mxu0 0.0
        %256 = vmatpush1.msra.mxu0 0.0
        %257 = vmatprep.subr.mxu0 0.0
        %258 = vmatpush1.msra.mxu0 0.0
        %259 = vmatprep.subr.mxu0 0.0
        %260 = vmatpush1.msra.mxu0 0.0
        %261 = vmatprep.subr.mxu0 0.0
        %262 = vmatpush1.msra.mxu0 0.0
        %263 = vmatprep.subr.mxu0 0.0
        %264 = vmatpush1.msra.mxu0 0.0
        %265 = vmatprep.subr.mxu0 0.0
        %266 = vmatpush1.msra.mxu0 0.0
        %267 = vmatprep.subr.mxu0 0.0
        %268 = vmatpush1.msra.mxu0 0.0
        %269 = vmatprep.subr.mxu0 0.0
        %270 = vmatpush1.msra.mxu0 0.0
        %271 = vmatprep.subr.mxu0 0.0
        %272 = vmatpush1.msra.mxu0 0.0
        %273 = vmatprep.subr.mxu0 0.0
        %274 = vmatpush1.msra.mxu0 0.0
        %275 = vmatprep.subr.mxu0 0.0
        %276 = vmatpush1.msra.mxu0 0.0
        %277 = vmatprep.subr.mxu0 0.0
        %278 = vmatpush1.msra.mxu0 0.0
        %279 = vmatprep.subr.mxu0 0.0
        %280 = vmatpush1.msra.mxu0 0.0
        %281 = vmatprep.subr.mxu0 0.0
        %282 = vmatpush1.msra.mxu0 0.0
        %283 = vmatprep.subr.mxu0 0.0
        %284 = vmatpush1.msra.mxu0 0.0
        %285 = vmatprep.subr.mxu0 0.0
        %286 = vmatpush1.msra.mxu0 0.0
        %287 = vmatprep.subr.mxu0 0.0
        %288 = vmatpush1.msra.mxu0 0.0
        %289 = vmatprep.subr.mxu0 0.0
        %290 = vmatpush1.msra.mxu0 0.0
        %291 = vmatprep.subr.mxu0 0.0
        %292 = vmatpush1.msra.mxu0 0.0
        %293 = vmatprep.subr.mxu0 0.0
        %294 = vmatpush1.msra.mxu0 0.0
        %295 = vmatprep.subr.mxu0 0.0
        %296 = vmatpush1.msra.mxu0 0.0
        %297 = vmatprep.subr.mxu0 0.0
        %298 = vmatpush1.msra.mxu0 0.0
        %299 = vmatprep.subr.mxu0 0.0
        %300 = vmatpush1.msra.mxu0 0.0
        %301 = vmatprep.subr.mxu0 0.0
        %302 = vmatpush1.msra.mxu0 0.0
        %303 = vmatprep.subr.mxu0 0.0
        %304 = vmatpush1.msra.mxu0 0.0
        %305 = vmatprep.subr.mxu0 0.0
        %306 = vmatpush1.msra.mxu0 0.0
        %307 = vmatprep.subr.mxu0 0.0
        %308 = vmatpush1.msra.mxu0 0.0
        %309 = vmatprep.mubr.f32.mxu0 0.0
        %310 = vmatmul.mubr.f32.gmra.mrb[0].mxu0 %v243
        %v311 = vpop.f32.mrb[0].mxu0
        %v312 = vadd.f32 0.0, %v311
        %v313 = vpop.f32.mrb[0].mxu0
        %314 = vdwg.mxu0
        %vm315 = vcmask 519168
        %v316 = vsel %vm315, %v312, 0.0
        %317 = vadd.xlane.f32.xlu0 %v316
        %v318 = vpop.xlane.xlu0 %317
        %v319 = vmul.f32 %v312, %v312
        %v320 = vsel %vm315, %v319, 0.0
        %321 = vadd.xlane.f32.xlu0 %v320
        %v322 = vpop.xlane.xlu0 %321
        %v323 = vmul.f32 %v318, 0.015625
        %v324 = vmul.f32 %v322, 0.015625
        %v325 = vmul.f32 %v323, %v323
        %v326 = vsub.f32 %v324, %v325
        %v327 = vmax.f32 %v326, 0.0
        %v328 = vsub.f32 %v312, %v323
        %v329 = vadd.f32 %v327, 1e-05
        %v330 = vrsqrt.pop %v329
        %v331 = vmul.f32 %v328, %v330
        %v332 = vmax.f32 %v331, 0.0
        %v333 = vld [vmem:[%s2] sm:$0xf]
        %vm334 = vcmask 31744
        %v336 = vsel %vm334, %v333, 0
        %vm338 = vcmask 1043456
        %v340 = vsel %vm338, %v332, 0
        %342 = vmatprep.subr.mxu0 0.0
        %343 = vmatpush1.msra.mxu0 %v340
        %344 = vmatprep.subr.mxu0 0.0
        %345 = vmatpush1.msra.mxu0 0.0
        %346 = vmatprep.subr.mxu0 0.0
        %347 = vmatpush1.msra.mxu0 0.0
        %348 = vmatprep.subr.mxu0 0.0
        %349 = vmatpush1.msra.mxu0 0.0
        %350 = vmatprep.subr.mxu0 0.0
        %351 = vmatpush1.msra.mxu0 0.0
        %352 = vmatprep.subr.mxu0 0.0
        %353 = vmatpush1.msra.mxu0 0.0
        %354 = vmatprep.subr.mxu0 0.0
        %355 = vmatpush1.msra.mxu0 0.0
        %356 = vmatprep.subr.mxu0 0.0
        %357 = vmatpush1.msra.mxu0 0.0
        %358 = vmatprep.subr.mxu0 0.0
        %359 = vmatpush1.msra.mxu0 0.0
        %360 = vmatprep.subr.mxu0 0.0
        %361 = vmatpush1.msra.mxu0 0.0
        %362 = vmatprep.subr.mxu0 0.0
        %363 = vmatpush1.msra.mxu0 0.0
        %364 = vmatprep.subr.mxu0 0.0
        %365 = vmatpush1.msra.mxu0 0.0
        %366 = vmatprep.subr.mxu0 0.0
        %367 = vmatpush1.msra.mxu0 0.0
        %368 = vmatprep.subr.mxu0 0.0
        %369 = vmatpush1.msra.mxu0 0.0
        %370 = vmatprep.subr.mxu0 0.0
        %371 = vmatpush1.msra.mxu0 0.0
        %372 = vmatprep.subr.mxu0 0.0
        %373 = vmatpush1.msra.mxu0 0.0
        %374 = vmatprep.subr.mxu0 0.0
        %375 = vmatpush1.msra.mxu0 0.0
        %376 = vmatprep.subr.mxu0 0.0
        %377 = vmatpush1.msra.mxu0 0.0
        %378 = vmatprep.subr.mxu0 0.0
        %379 = vmatpush1.msra.mxu0 0.0
        %380 = vmatprep.subr.mxu0 0.0
        %381 = vmatpush1.msra.mxu0 0.0
        %382 = vmatprep.subr.mxu0 0.0
        %383 = vmatpush1.msra.mxu0 0.0
        %384 = vmatprep.subr.mxu0 0.0
        %385 = vmatpush1.msra.mxu0 0.0
        %386 = vmatprep.subr.mxu0 0.0
        %387 = vmatpush1.msra.mxu0 0.0
        %388 = vmatprep.subr.mxu0 0.0
        %389 = vmatpush1.msra.mxu0 0.0
        %390 = vmatprep.subr.mxu0 0.0
        %391 = vmatpush1.msra.mxu0 0.0
        %392 = vmatprep.subr.mxu0 0.0
        %393 = vmatpush1.msra.mxu0 0.0
        %394 = vmatprep.subr.mxu0 0.0
        %395 = vmatpush1.msra.mxu0 0.0
        %396 = vmatprep.subr.mxu0 0.0
        %397 = vmatpush1.msra.mxu0 0.0
        %398 = vmatprep.subr.mxu0 0.0
        %399 = vmatpush1.msra.mxu0 0.0
        %400 = vmatprep.subr.mxu0 0.0
        %401 = vmatpush1.msra.mxu0 0.0
        %402 = vmatprep.subr.mxu0 0.0
        %403 = vmatpush1.msra.mxu0 0.0
        %404 = vmatprep.subr.mxu0 0.0
        %405 = vmatpush1.msra.mxu0 0.0
        %406 = vmatprep.mubr.f32.mxu0 0.0
        %407 = vmatmul.mubr.f32.gmra.mrb[0].mxu0 %v336
        %v408 = vpop.f32.mrb[0].mxu0
        %v409 = vadd.f32 0.0, %v408
        %v410 = vpop.f32.mrb[0].mxu0
        %411 = vdwg.mxu0
        %v412 = vld [vmem:[#allocation2] sm:$0xff]
        %v413 = vld [vmem:[#allocation2 + $0x8] sm:$0xff]
        %v414 = vld [vmem:[#allocation2 + $0x10] sm:$0xff]
        %v415 = vld [vmem:[#allocation2 + $0x18] sm:$0xff]
        %v416 = vld [vmem:[#allocation2 + $0x20] sm:$0xff]
        %v417 = vld [vmem:[#allocation2 + $0x28] sm:$0xff]
        %v418 = vld [vmem:[#allocation2 + $0x30] sm:$0xff]
        %v419 = vld [vmem:[#allocation2 + $0x38] sm:$0xff]
        %v420 = vld [vmem:[#allocation2 + $0x40] sm:$0xff]
        %v421 = vld [vmem:[#allocation2 + $0x48] sm:$0xff]
        %v422 = vld [vmem:[#allocation2 + $0x50] sm:$0xff]
        %v423 = vld [vmem:[#allocation2 + $0x58] sm:$0xff]
        %v424 = vld [vmem:[#allocation2 + $0x60] sm:$0xff]
        %v425 = vld [vmem:[#allocation2 + $0x68] sm:$0xff]
        %v426 = vld [vmem:[#allocation2 + $0x70] sm:$0xff]
        %v427 = vld [vmem:[#allocation2 + $0x78] sm:$0xff]
        %s428 = scalar_lea.vmem %s2, 4
        %v429 = vld [vmem:[%s428] sm:$0xf]
        %v431 = vsel %vm334, %v429, 0
        %433 = vmatprep.subr.mxu0 0.0
        %434 = vmatpush1.msra.mxu0 %v340
        %435 = vmatprep.subr.mxu0 0.0
        %436 = vmatpush1.msra.mxu0 0.0
        %437 = vmatprep.subr.mxu0 0.0
        %438 = vmatpush1.msra.mxu0 0.0
        %439 = vmatprep.subr.mxu0 0.0
        %440 = vmatpush1.msra.mxu0 0.0
        %441 = vmatprep.subr.mxu0 0.0
        %442 = vmatpush1.msra.mxu0 0.0
        %443 = vmatprep.subr.mxu0 0.0
        %444 = vmatpush1.msra.mxu0 0.0
        %445 = vmatprep.subr.mxu0 0.0
        %446 = vmatpush1.msra.mxu0 0.0
        %447 = vmatprep.subr.mxu0 0.0
        %448 = vmatpush1.msra.mxu0 0.0
        %449 = vmatprep.subr.mxu0 0.0
        %450 = vmatpush1.msra.mxu0 0.0
        %451 = vmatprep.subr.mxu0 0.0
        %452 = vmatpush1.msra.mxu0 0.0
        %453 = vmatprep.subr.mxu0 0.0
        %454 = vmatpush1.msra.mxu0 0.0
        %455 = vmatprep.subr.mxu0 0.0
        %456 = vmatpush1.msra.mxu0 0.0
        %457 = vmatprep.subr.mxu0 0.0
        %458 = vmatpush1.msra.mxu0 0.0
        %459 = vmatprep.subr.mxu0 0.0
        %460 = vmatpush1.msra.mxu0 0.0
        %461 = vmatprep.subr.mxu0 0.0
        %462 = vmatpush1.msra.mxu0 0.0
        %463 = vmatprep.subr.mxu0 0.0
        %464 = vmatpush1.msra.mxu0 0.0
        %465 = vmatprep.subr.mxu0 0.0
        %466 = vmatpush1.msra.mxu0 0.0
        %467 = vmatprep.subr.mxu0 0.0
        %468 = vmatpush1.msra.mxu0 0.0
        %469 = vmatprep.subr.mxu0 0.0
        %470 = vmatpush1.msra.mxu0 0.0
        %471 = vmatprep.subr.mxu0 0.0
        %472 = vmatpush1.msra.mxu0 0.0
        %473 = vmatprep.subr.mxu0 0.0
        %474 = vmatpush1.msra.mxu0 0.0
        %475 = vmatprep.subr.mxu0 0.0
        %476 = vmatpush1.msra.mxu0 0.0
        %477 = vmatprep.subr.mxu0 0.0
        %478 = vmatpush1.msra.mxu0 0.0
        %479 = vmatprep.subr.mxu0 0.0
        %480 = vmatpush1.msra.mxu0 0.0
        %481 = vmatprep.subr.mxu0 0.0
        %482 = vmatpush1.msra.mxu0 0.0
        %483 = vmatprep.subr.mxu0 0.0
        %484 = vmatpush1.msra.mxu0 0.0
        %485 = vmatprep.subr.mxu0 0.0
        %486 = vmatpush1.msra.mxu0 0.0
        %487 = vmatprep.subr.mxu0 0.0
        %488 = vmatpush1.msra.mxu0 0.0
        %489 = vmatprep.subr.mxu0 0.0
        %490 = vmatpush1.msra.mxu0 0.0
        %491 = vmatprep.subr.mxu0 0.0
        %492 = vmatpush1.msra.mxu0 0.0
        %493 = vmatprep.subr.mxu0 0.0
        %494 = vmatpush1.msra.mxu0 0.0
        %495 = vmatprep.subr.mxu0 0.0
        %496 = vmatpush1.msra.mxu0 0.0
        %497 = vmatprep.mubr.f32.mxu0 0.0
        %498 = vmatmul.mubr.f32.gmra.mrb[0].mxu0 %v431
        %v499 = vpop.f32.mrb[0].mxu0
        %v500 = vadd.f32 0.0, %v499
        %v501 = vpop.f32.mrb[0].mxu0
        %502 = vdwg.mxu0
        %s503 = scalar_lea.vmem [#allocation2], 128
        %v504 = vld [vmem:[%s503] sm:$0xff]
        %v505 = vld [vmem:[%s503 + $0x8] sm:$0xff]
        %v506 = vld [vmem:[%s503 + $0x10] sm:$0xff]
        %v507 = vld [vmem:[%s503 + $0x18] sm:$0xff]
        %v508 = vld [vmem:[%s503 + $0x20] sm:$0xff]
        %v509 = vld [vmem:[%s503 + $0x28] sm:$0xff]
        %v510 = vld [vmem:[%s503 + $0x30] sm:$0xff]
        %v511 = vld [vmem:[%s503 + $0x38] sm:$0xff]
        %v512 = vld [vmem:[%s503 + $0x40] sm:$0xff]
        %v513 = vld [vmem:[%s503 + $0x48] sm:$0xff]
        %v514 = vld [vmem:[%s503 + $0x50] sm:$0xff]
        %v515 = vld [vmem:[%s503 + $0x58] sm:$0xff]
        %v516 = vld [vmem:[%s503 + $0x60] sm:$0xff]
        %v517 = vld [vmem:[%s503 + $0x68] sm:$0xff]
        %v518 = vld [vmem:[%s503 + $0x70] sm:$0xff]
        %v519 = vld [vmem:[%s503 + $0x78] sm:$0xff]
        %vm520 = vcmask 523264
        %v522 = vsel %vm520, %v500, 0
        %524 = vmatprep.subr.mxu0 %v505
        %525 = vmatpush1.msra.mxu0 %v504
        %526 = vmatprep.subr.mxu0 %v507
        %527 = vmatpush1.msra.mxu0 %v506
        %528 = vmatprep.subr.mxu0 %v509
        %529 = vmatpush1.msra.mxu0 %v508
        %530 = vmatprep.subr.mxu0 %v511
        %531 = vmatpush1.msra.mxu0 %v510
        %532 = vmatprep.subr.mxu0 %v513
        %533 = vmatpush1.msra.mxu0 %v512
        %534 = vmatprep.subr.mxu0 %v515
        %535 = vmatpush1.msra.mxu0 %v514
        %536 = vmatprep.subr.mxu0 %v517
        %537 = vmatpush1.msra.mxu0 %v516
        %538 = vmatprep.subr.mxu0 %v519
        %539 = vmatpush1.msra.mxu0 %v518
        %540 = vmatprep.subr.mxu0 0.0
        %541 = vmatpush1.msra.mxu0 0.0
        %542 = vmatprep.subr.mxu0 0.0
        %543 = vmatpush1.msra.mxu0 0.0
        %544 = vmatprep.subr.mxu0 0.0
        %545 = vmatpush1.msra.mxu0 0.0
        %546 = vmatprep.subr.mxu0 0.0
        %547 = vmatpush1.msra.mxu0 0.0
        %548 = vmatprep.subr.mxu0 0.0
        %549 = vmatpush1.msra.mxu0 0.0
        %550 = vmatprep.subr.mxu0 0.0
        %551 = vmatpush1.msra.mxu0 0.0
        %552 = vmatprep.subr.mxu0 0.0
        %553 = vmatpush1.msra.mxu0 0.0
        %554 = vmatprep.subr.mxu0 0.0
        %555 = vmatpush1.msra.mxu0 0.0
        %556 = vmatprep.subr.mxu0 0.0
        %557 = vmatpush1.msra.mxu0 0.0
        %558 = vmatprep.subr.mxu0 0.0
        %559 = vmatpush1.msra.mxu0 0.0
        %560 = vmatprep.subr.mxu0 0.0
        %561 = vmatpush1.msra.mxu0 0.0
        %562 = vmatprep.subr.mxu0 0.0
        %563 = vmatpush1.msra.mxu0 0.0
        %564 = vmatprep.subr.mxu0 0.0
        %565 = vmatpush1.msra.mxu0 0.0
        %566 = vmatprep.subr.mxu0 0.0
        %567 = vmatpush1.msra.mxu0 0.0
        %568 = vmatprep.subr.mxu0 0.0
        %569 = vmatpush1.msra.mxu0 0.0
        %570 = vmatprep.subr.mxu0 0.0
        %571 = vmatpush1.msra.mxu0 0.0
        %572 = vmatprep.subr.mxu0 0.0
        %573 = vmatpush1.msra.mxu0 0.0
        %574 = vmatprep.subr.mxu0 0.0
        %575 = vmatpush1.msra.mxu0 0.0
        %576 = vmatprep.subr.mxu0 0.0
        %577 = vmatpush1.msra.mxu0 0.0
        %578 = vmatprep.subr.mxu0 0.0
        %579 = vmatpush1.msra.mxu0 0.0
        %580 = vmatprep.subr.mxu0 0.0
        %581 = vmatpush1.msra.mxu0 0.0
        %582 = vmatprep.subr.mxu0 0.0
        %583 = vmatpush1.msra.mxu0 0.0
        %584 = vmatprep.subr.mxu0 0.0
        %585 = vmatpush1.msra.mxu0 0.0
        %586 = vmatprep.subr.mxu0 0.0
        %587 = vmatpush1.msra.mxu0 0.0
        %588 = vmatprep.mubr.f32.mxu0 0.0
        %589 = vmatmul.mubr.f32.gmra.mrb[0].mxu0 %v522
        %v590 = vpop.f32.mrb[0].mxu0
        %v591 = vadd.f32 0.0, %v590
        %v592 = vpop.f32.mrb[0].mxu0
        %v593 = vadd.f32 0.0, %v592
        %594 = vdwg.mxu0
        %v596 = vsel %vm520, %v409, 0
        %598 = vmatprep.subr.mxu0 %v413
        %599 = vmatpush1.msra.mxu0 %v412
        %600 = vmatprep.subr.mxu0 %v415
        %601 = vmatpush1.msra.mxu0 %v414
        %602 = vmatprep.subr.mxu0 %v417
        %603 = vmatpush1.msra.mxu0 %v416
        %604 = vmatprep.subr.mxu0 %v419
        %605 = vmatpush1.msra.mxu0 %v418
        %606 = vmatprep.subr.mxu0 %v421
        %607 = vmatpush1.msra.mxu0 %v420
        %608 = vmatprep.subr.mxu0 %v423
        %609 = vmatpush1.msra.mxu0 %v422
        %610 = vmatprep.subr.mxu0 %v425
        %611 = vmatpush1.msra.mxu0 %v424
        %612 = vmatprep.subr.mxu0 %v427
        %613 = vmatpush1.msra.mxu0 %v426
        %614 = vmatprep.subr.mxu0 0.0
        %615 = vmatpush1.msra.mxu0 0.0
        %616 = vmatprep.subr.mxu0 0.0
        %617 = vmatpush1.msra.mxu0 0.0
        %618 = vmatprep.subr.mxu0 0.0
        %619 = vmatpush1.msra.mxu0 0.0
        %620 = vmatprep.subr.mxu0 0.0
        %621 = vmatpush1.msra.mxu0 0.0
        %622 = vmatprep.subr.mxu0 0.0
        %623 = vmatpush1.msra.mxu0 0.0
        %624 = vmatprep.subr.mxu0 0.0
        %625 = vmatpush1.msra.mxu0 0.0
        %626 = vmatprep.subr.mxu0 0.0
        %627 = vmatpush1.msra.mxu0 0.0
        %628 = vmatprep.subr.mxu0 0.0
        %629 = vmatpush1.msra.mxu0 0.0
        %630 = vmatprep.subr.mxu0 0.0
        %631 = vmatpush1.msra.mxu0 0.0
        %632 = vmatprep.subr.mxu0 0.0
        %633 = vmatpush1.msra.mxu0 0.0
        %634 = vmatprep.subr.mxu0 0.0
        %635 = vmatpush1.msra.mxu0 0.0
        %636 = vmatprep.subr.mxu0 0.0
        %637 = vmatpush1.msra.mxu0 0.0
        %638 = vmatprep.subr.mxu0 0.0
        %639 = vmatpush1.msra.mxu0 0.0
        %640 = vmatprep.subr.mxu0 0.0
        %641 = vmatpush1.msra.mxu0 0.0
        %642 = vmatprep.subr.mxu0 0.0
        %643 = vmatpush1.msra.mxu0 0.0
        %644 = vmatprep.subr.mxu0 0.0
        %645 = vmatpush1.msra.mxu0 0.0
        %646 = vmatprep.subr.mxu0 0.0
        %647 = vmatpush1.msra.mxu0 0.0
        %648 = vmatprep.subr.mxu0 0.0
        %649 = vmatpush1.msra.mxu0 0.0
        %650 = vmatprep.subr.mxu0 0.0
        %651 = vmatpush1.msra.mxu0 0.0
        %652 = vmatprep.subr.mxu0 0.0
        %653 = vmatpush1.msra.mxu0 0.0
        %654 = vmatprep.subr.mxu0 0.0
        %655 = vmatpush1.msra.mxu0 0.0
        %656 = vmatprep.subr.mxu0 0.0
        %657 = vmatpush1.msra.mxu0 0.0
        %658 = vmatprep.subr.mxu0 0.0
        %659 = vmatpush1.msra.mxu0 0.0
        %660 = vmatprep.subr.mxu0 0.0
        %661 = vmatpush1.msra.mxu0 0.0
        %662 = vmatprep.mubr.f32.mxu0 0.0
        %663 = vmatmul.mubr.f32.gmra.mrb[0].mxu0 %v596
        %v664 = vpop.f32.mrb[0].mxu0
        %v665 = vadd.f32 %v591, %v664
        %v666 = vpop.f32.mrb[0].mxu0
        %v667 = vadd.f32 %v593, %v666
        %668 = vdwg.mxu0
        %s669 = scalar_lea.vmem %s2, 8
        %v670 = vld [vmem:[%s669] sm:$0xf]
        %v672 = vsel %vm334, %v670, 0
        %674 = vmatprep.subr.mxu0 0.0
        %675 = vmatpush1.msra.mxu0 %v340
        %676 = vmatprep.subr.mxu0 0.0
        %677 = vmatpush1.msra.mxu0 0.0
        %678 = vmatprep.subr.mxu0 0.0
        %679 = vmatpush1.msra.mxu0 0.0
        %680 = vmatprep.subr.mxu0 0.0
        %681 = vmatpush1.msra.mxu0 0.0
        %682 = vmatprep.subr.mxu0 0.0
        %683 = vmatpush1.msra.mxu0 0.0
        %684 = vmatprep.subr.mxu0 0.0
        %685 = vmatpush1.msra.mxu0 0.0
        %686 = vmatprep.subr.mxu0 0.0
        %687 = vmatpush1.msra.mxu0 0.0
        %688 = vmatprep.subr.mxu0 0.0
        %689 = vmatpush1.msra.mxu0 0.0
        %690 = vmatprep.subr.mxu0 0.0
        %691 = vmatpush1.msra.mxu0 0.0
        %692 = vmatprep.subr.mxu0 0.0
        %693 = vmatpush1.msra.mxu0 0.0
        %694 = vmatprep.subr.mxu0 0.0
        %695 = vmatpush1.msra.mxu0 0.0
        %696 = vmatprep.subr.mxu0 0.0
        %697 = vmatpush1.msra.mxu0 0.0
        %698 = vmatprep.subr.mxu0 0.0
        %699 = vmatpush1.msra.mxu0 0.0
        %700 = vmatprep.subr.mxu0 0.0
        %701 = vmatpush1.msra.mxu0 0.0
        %702 = vmatprep.subr.mxu0 0.0
        %703 = vmatpush1.msra.mxu0 0.0
        %704 = vmatprep.subr.mxu0 0.0
        %705 = vmatpush1.msra.mxu0 0.0
        %706 = vmatprep.subr.mxu0 0.0
        %707 = vmatpush1.msra.mxu0 0.0
        %708 = vmatprep.subr.mxu0 0.0
        %709 = vmatpush1.msra.mxu0 0.0
        %710 = vmatprep.subr.mxu0 0.0
        %711 = vmatpush1.msra.mxu0 0.0
        %712 = vmatprep.subr.mxu0 0.0
        %713 = vmatpush1.msra.mxu0 0.0
        %714 = vmatprep.subr.mxu0 0.0
        %715 = vmatpush1.msra.mxu0 0.0
        %716 = vmatprep.subr.mxu0 0.0
        %717 = vmatpush1.msra.mxu0 0.0
        %718 = vmatprep.subr.mxu0 0.0
        %719 = vmatpush1.msra.mxu0 0.0
        %720 = vmatprep.subr.mxu0 0.0
        %721 = vmatpush1.msra.mxu0 0.0
        %722 = vmatprep.subr.mxu0 0.0
        %723 = vmatpush1.msra.mxu0 0.0
        %724 = vmatprep.subr.mxu0 0.0
        %725 = vmatpush1.msra.mxu0 0.0
        %726 = vmatprep.subr.mxu0 0.0
        %727 = vmatpush1.msra.mxu0 0.0
        %728 = vmatprep.subr.mxu0 0.0
        %729 = vmatpush1.msra.mxu0 0.0
        %730 = vmatprep.subr.mxu0 0.0
        %731 = vmatpush1.msra.mxu0 0.0
        %732 = vmatprep.subr.mxu0 0.0
        %733 = vmatpush1.msra.mxu0 0.0
        %734 = vmatprep.subr.mxu0 0.0
        %735 = vmatpush1.msra.mxu0 0.0
        %736 = vmatprep.subr.mxu0 0.0
        %737 = vmatpush1.msra.mxu0 0.0
        %738 = vmatprep.mubr.f32.mxu0 0.0
        %739 = vmatmul.mubr.f32.gmra.mrb[0].mxu0 %v672
        %v740 = vpop.f32.mrb[0].mxu0
        %v741 = vadd.f32 0.0, %v740
        %v742 = vpop.f32.mrb[0].mxu0
        %743 = vdwg.mxu0
        %s744 = scalar_lea.vmem [#allocation2], 256
        %v745 = vld [vmem:[%s744] sm:$0xff]
        %v746 = vld [vmem:[%s744 + $0x8] sm:$0xff]
        %v747 = vld [vmem:[%s744 + $0x10] sm:$0xff]
        %v748 = vld [vmem:[%s744 + $0x18] sm:$0xff]
        %v749 = vld [vmem:[%s744 + $0x20] sm:$0xff]
        %v750 = vld [vmem:[%s744 + $0x28] sm:$0xff]
        %v751 = vld [vmem:[%s744 + $0x30] sm:$0xff]
        %v752 = vld [vmem:[%s744 + $0x38] sm:$0xff]
        %v753 = vld [vmem:[%s744 + $0x40] sm:$0xff]
        %v754 = vld [vmem:[%s744 + $0x48] sm:$0xff]
        %v755 = vld [vmem:[%s744 + $0x50] sm:$0xff]
        %v756 = vld [vmem:[%s744 + $0x58] sm:$0xff]
        %v757 = vld [vmem:[%s744 + $0x60] sm:$0xff]
        %v758 = vld [vmem:[%s744 + $0x68] sm:$0xff]
        %v759 = vld [vmem:[%s744 + $0x70] sm:$0xff]
        %v760 = vld [vmem:[%s744 + $0x78] sm:$0xff]
        %v762 = vsel %vm520, %v741, 0
        %764 = vmatprep.subr.mxu0 %v746
        %765 = vmatpush1.msra.mxu0 %v745
        %766 = vmatprep.subr.mxu0 %v748
        %767 = vmatpush1.msra.mxu0 %v747
        %768 = vmatprep.subr.mxu0 %v750
        %769 = vmatpush1.msra.mxu0 %v749
        %770 = vmatprep.subr.mxu0 %v752
        %771 = vmatpush1.msra.mxu0 %v751
        %772 = vmatprep.subr.mxu0 %v754
        %773 = vmatpush1.msra.mxu0 %v753
        %774 = vmatprep.subr.mxu0 %v756
        %775 = vmatpush1.msra.mxu0 %v755
        %776 = vmatprep.subr.mxu0 %v758
        %777 = vmatpush1.msra.mxu0 %v757
        %778 = vmatprep.subr.mxu0 %v760
        %779 = vmatpush1.msra.mxu0 %v759
        %780 = vmatprep.subr.mxu0 0.0
        %781 = vmatpush1.msra.mxu0 0.0
        %782 = vmatprep.subr.mxu0 0.0
        %783 = vmatpush1.msra.mxu0 0.0
        %784 = vmatprep.subr.mxu0 0.0
        %785 = vmatpush1.msra.mxu0 0.0
        %786 = vmatprep.subr.mxu0 0.0
        %787 = vmatpush1.msra.mxu0 0.0
        %788 = vmatprep.subr.mxu0 0.0
        %789 = vmatpush1.msra.mxu0 0.0
        %790 = vmatprep.subr.mxu0 0.0
        %791 = vmatpush1.msra.mxu0 0.0
        %792 = vmatprep.subr.mxu0 0.0
        %793 = vmatpush1.msra.mxu0 0.0
        %794 = vmatprep.subr.mxu0 0.0
        %795 = vmatpush1.msra.mxu0 0.0
        %796 = vmatprep.subr.mxu0 0.0
        %797 = vmatpush1.msra.mxu0 0.0
        %798 = vmatprep.subr.mxu0 0.0
        %799 = vmatpush1.msra.mxu0 0.0
        %800 = vmatprep.subr.mxu0 0.0
        %801 = vmatpush1.msra.mxu0 0.0
        %802 = vmatprep.subr.mxu0 0.0
        %803 = vmatpush1.msra.mxu0 0.0
        %804 = vmatprep.subr.mxu0 0.0
        %805 = vmatpush1.msra.mxu0 0.0
        %806 = vmatprep.subr.mxu0 0.0
        %807 = vmatpush1.msra.mxu0 0.0
        %808 = vmatprep.subr.mxu0 0.0
        %809 = vmatpush1.msra.mxu0 0.0
        %810 = vmatprep.subr.mxu0 0.0
        %811 = vmatpush1.msra.mxu0 0.0
        %812 = vmatprep.subr.mxu0 0.0
        %813 = vmatpush1.msra.mxu0 0.0
        %814 = vmatprep.subr.mxu0 0.0
        %815 = vmatpush1.msra.mxu0 0.0
        %816 = vmatprep.subr.mxu0 0.0
        %817 = vmatpush1.msra.mxu0 0.0
        %818 = vmatprep.subr.mxu0 0.0
        %819 = vmatpush1.msra.mxu0 0.0
        %820 = vmatprep.subr.mxu0 0.0
        %821 = vmatpush1.msra.mxu0 0.0
        %822 = vmatprep.subr.mxu0 0.0
        %823 = vmatpush1.msra.mxu0 0.0
        %824 = vmatprep.subr.mxu0 0.0
        %825 = vmatpush1.msra.mxu0 0.0
        %826 = vmatprep.subr.mxu0 0.0
        %827 = vmatpush1.msra.mxu0 0.0
        %828 = vmatprep.mubr.f32.mxu0 0.0
        %829 = vmatmul.mubr.f32.gmra.mrb[0].mxu0 %v762
        %v830 = vpop.f32.mrb[0].mxu0
        %v831 = vadd.f32 0.0, %v830
        %v832 = vpop.f32.mrb[0].mxu0
        %v833 = vadd.f32 0.0, %v832
        %834 = vdwg.mxu0
        %v835 = vadd.f32 %v665, %v831
        %v836 = vadd.f32 %v667, %v833
        %s837 = scalar_lea.vmem %s2, 12
        %v838 = vld [vmem:[%s837] sm:$0xf]
        %v840 = vsel %vm334, %v838, 0
        %842 = vmatprep.subr.mxu0 0.0
        %843 = vmatpush1.msra.mxu0 %v340
        %844 = vmatprep.subr.mxu0 0.0
        %845 = vmatpush1.msra.mxu0 0.0
        %846 = vmatprep.subr.mxu0 0.0
        %847 = vmatpush1.msra.mxu0 0.0
        %848 = vmatprep.subr.mxu0 0.0
        %849 = vmatpush1.msra.mxu0 0.0
        %850 = vmatprep.subr.mxu0 0.0
        %851 = vmatpush1.msra.mxu0 0.0
        %852 = vmatprep.subr.mxu0 0.0
        %853 = vmatpush1.msra.mxu0 0.0
        %854 = vmatprep.subr.mxu0 0.0
        %855 = vmatpush1.msra.mxu0 0.0
        %856 = vmatprep.subr.mxu0 0.0
        %857 = vmatpush1.msra.mxu0 0.0
        %858 = vmatprep.subr.mxu0 0.0
        %859 = vmatpush1.msra.mxu0 0.0
        %860 = vmatprep.subr.mxu0 0.0
        %861 = vmatpush1.msra.mxu0 0.0
        %862 = vmatprep.subr.mxu0 0.0
        %863 = vmatpush1.msra.mxu0 0.0
        %864 = vmatprep.subr.mxu0 0.0
        %865 = vmatpush1.msra.mxu0 0.0
        %866 = vmatprep.subr.mxu0 0.0
        %867 = vmatpush1.msra.mxu0 0.0
        %868 = vmatprep.subr.mxu0 0.0
        %869 = vmatpush1.msra.mxu0 0.0
        %870 = vmatprep.subr.mxu0 0.0
        %871 = vmatpush1.msra.mxu0 0.0
        %872 = vmatprep.subr.mxu0 0.0
        %873 = vmatpush1.msra.mxu0 0.0
        %874 = vmatprep.subr.mxu0 0.0
        %875 = vmatpush1.msra.mxu0 0.0
        %876 = vmatprep.subr.mxu0 0.0
        %877 = vmatpush1.msra.mxu0 0.0
        %878 = vmatprep.subr.mxu0 0.0
        %879 = vmatpush1.msra.mxu0 0.0
        %880 = vmatprep.subr.mxu0 0.0
        %881 = vmatpush1.msra.mxu0 0.0
        %882 = vmatprep.subr.mxu0 0.0
        %883 = vmatpush1.msra.mxu0 0.0
        %884 = vmatprep.subr.mxu0 0.0
        %885 = vmatpush1.msra.mxu0 0.0
        %886 = vmatprep.subr.mxu0 0.0
        %887 = vmatpush1.msra.mxu0 0.0
        %888 = vmatprep.subr.mxu0 0.0
        %889 = vmatpush1.msra.mxu0 0.0
        %890 = vmatprep.subr.mxu0 0.0
        %891 = vmatpush1.msra.mxu0 0.0
        %892 = vmatprep.subr.mxu0 0.0
        %893 = vmatpush1.msra.mxu0 0.0
        %894 = vmatprep.subr.mxu0 0.0
        %895 = vmatpush1.msra.mxu0 0.0
        %896 = vmatprep.subr.mxu0 0.0
        %897 = vmatpush1.msra.mxu0 0.0
        %898 = vmatprep.subr.mxu0 0.0
        %899 = vmatpush1.msra.mxu0 0.0
        %900 = vmatprep.subr.mxu0 0.0
        %901 = vmatpush1.msra.mxu0 0.0
        %902 = vmatprep.subr.mxu0 0.0
        %903 = vmatpush1.msra.mxu0 0.0
        %904 = vmatprep.subr.mxu0 0.0
        %905 = vmatpush1.msra.mxu0 0.0
        %906 = vmatprep.mubr.f32.mxu0 0.0
        %907 = vmatmul.mubr.f32.gmra.mrb[0].mxu0 %v840
        %v908 = vpop.f32.mrb[0].mxu0
        %v909 = vadd.f32 0.0, %v908
        %v910 = vpop.f32.mrb[0].mxu0
        %911 = vdwg.mxu0
        %s912 = scalar_lea.vmem [#allocation2], 384
        %v913 = vld [vmem:[%s912] sm:$0xff]
        %v914 = vld [vmem:[%s912 + $0x8] sm:$0xff]
        %v915 = vld [vmem:[%s912 + $0x10] sm:$0xff]
        %v916 = vld [vmem:[%s912 + $0x18] sm:$0xff]
        %v917 = vld [vmem:[%s912 + $0x20] sm:$0xff]
        %v918 = vld [vmem:[%s912 + $0x28] sm:$0xff]
        %v919 = vld [vmem:[%s912 + $0x30] sm:$0xff]
        %v920 = vld [vmem:[%s912 + $0x38] sm:$0xff]
        %v921 = vld [vmem:[%s912 + $0x40] sm:$0xff]
        %v922 = vld [vmem:[%s912 + $0x48] sm:$0xff]
        %v923 = vld [vmem:[%s912 + $0x50] sm:$0xff]
        %v924 = vld [vmem:[%s912 + $0x58] sm:$0xff]
        %v925 = vld [vmem:[%s912 + $0x60] sm:$0xff]
        %v926 = vld [vmem:[%s912 + $0x68] sm:$0xff]
        %v927 = vld [vmem:[%s912 + $0x70] sm:$0xff]
        %v928 = vld [vmem:[%s912 + $0x78] sm:$0xff]
        %v930 = vsel %vm520, %v909, 0
        %932 = vmatprep.subr.mxu0 %v914
        %933 = vmatpush1.msra.mxu0 %v913
        %934 = vmatprep.subr.mxu0 %v916
        %935 = vmatpush1.msra.mxu0 %v915
        %936 = vmatprep.subr.mxu0 %v918
        %937 = vmatpush1.msra.mxu0 %v917
        %938 = vmatprep.subr.mxu0 %v920
        %939 = vmatpush1.msra.mxu0 %v919
        %940 = vmatprep.subr.mxu0 %v922
        %941 = vmatpush1.msra.mxu0 %v921
        %942 = vmatprep.subr.mxu0 %v924
        %943 = vmatpush1.msra.mxu0 %v923
        %944 = vmatprep.subr.mxu0 %v926
        %945 = vmatpush1.msra.mxu0 %v925
        %946 = vmatprep.subr.mxu0 %v928
        %947 = vmatpush1.msra.mxu0 %v927
        %948 = vmatprep.subr.mxu0 0.0
        %949 = vmatpush1.msra.mxu0 0.0
        %950 = vmatprep.subr.mxu0 0.0
        %951 = vmatpush1.msra.mxu0 0.0
        %952 = vmatprep.subr.mxu0 0.0
        %953 = vmatpush1.msra.mxu0 0.0
        %954 = vmatprep.subr.mxu0 0.0
        %955 = vmatpush1.msra.mxu0 0.0
        %956 = vmatprep.subr.mxu0 0.0
        %957 = vmatpush1.msra.mxu0 0.0
        %958 = vmatprep.subr.mxu0 0.0
        %959 = vmatpush1.msra.mxu0 0.0
        %960 = vmatprep.subr.mxu0 0.0
        %961 = vmatpush1.msra.mxu0 0.0
        %962 = vmatprep.subr.mxu0 0.0
        %963 = vmatpush1.msra.mxu0 0.0
        %964 = vmatprep.subr.mxu0 0.0
        %965 = vmatpush1.msra.mxu0 0.0
        %966 = vmatprep.subr.mxu0 0.0
        %967 = vmatpush1.msra.mxu0 0.0
        %968 = vmatprep.subr.mxu0 0.0
        %969 = vmatpush1.msra.mxu0 0.0
        %970 = vmatprep.subr.mxu0 0.0
        %971 = vmatpush1.msra.mxu0 0.0
        %972 = vmatprep.subr.mxu0 0.0
        %973 = vmatpush1.msra.mxu0 0.0
        %974 = vmatprep.subr.mxu0 0.0
        %975 = vmatpush1.msra.mxu0 0.0
        %976 = vmatprep.subr.mxu0 0.0
        %977 = vmatpush1.msra.mxu0 0.0
        %978 = vmatprep.subr.mxu0 0.0
        %979 = vmatpush1.msra.mxu0 0.0
        %980 = vmatprep.subr.mxu0 0.0
        %981 = vmatpush1.msra.mxu0 0.0
        %982 = vmatprep.subr.mxu0 0.0
        %983 = vmatpush1.msra.mxu0 0.0
        %984 = vmatprep.subr.mxu0 0.0
        %985 = vmatpush1.msra.mxu0 0.0
        %986 = vmatprep.subr.mxu0 0.0
        %987 = vmatpush1.msra.mxu0 0.0
        %988 = vmatprep.subr.mxu0 0.0
        %989 = vmatpush1.msra.mxu0 0.0
        %990 = vmatprep.subr.mxu0 0.0
        %991 = vmatpush1.msra.mxu0 0.0
        %992 = vmatprep.subr.mxu0 0.0
        %993 = vmatpush1.msra.mxu0 0.0
        %994 = vmatprep.subr.mxu0 0.0
        %995 = vmatpush1.msra.mxu0 0.0
        %996 = vmatprep.mubr.f32.mxu0 0.0
        %997 = vmatmul.mubr.f32.gmra.mrb[0].mxu0 %v930
        %v998 = vpop.f32.mrb[0].mxu0
        %v999 = vadd.f32 0.0, %v998
        %v1000 = vpop.f32.mrb[0].mxu0
        %v1001 = vadd.f32 0.0, %v1000
        %1002 = vdwg.mxu0
        %v1003 = vadd.f32 %v835, %v999
        %v1004 = vadd.f32 %v836, %v1001
        %s1005 = scalar_lea.vmem %s2, 16
        %v1006 = vld [vmem:[%s1005] sm:$0xf]
        %v1008 = vsel %vm334, %v1006, 0
        %1010 = vmatprep.subr.mxu0 0.0
        %1011 = vmatpush1.msra.mxu0 %v340
        %1012 = vmatprep.subr.mxu0 0.0
        %1013 = vmatpush1.msra.mxu0 0.0
        %1014 = vmatprep.subr.mxu0 0.0
        %1015 = vmatpush1.msra.mxu0 0.0
        %1016 = vmatprep.subr.mxu0 0.0
        %1017 = vmatpush1.msra.mxu0 0.0
        %1018 = vmatprep.subr.mxu0 0.0
        %1019 = vmatpush1.msra.mxu0 0.0
        %1020 = vmatprep.subr.mxu0 0.0
        %1021 = vmatpush1.msra.mxu0 0.0
        %1022 = vmatprep.subr.mxu0 0.0
        %1023 = vmatpush1.msra.mxu0 0.0
        %1024 = vmatprep.subr.mxu0 0.0
        %1025 = vmatpush1.msra.mxu0 0.0
        %1026 = vmatprep.subr.mxu0 0.0
        %1027 = vmatpush1.msra.mxu0 0.0
        %1028 = vmatprep.subr.mxu0 0.0
        %1029 = vmatpush1.msra.mxu0 0.0
        %1030 = vmatprep.subr.mxu0 0.0
        %1031 = vmatpush1.msra.mxu0 0.0
        %1032 = vmatprep.subr.mxu0 0.0
        %1033 = vmatpush1.msra.mxu0 0.0
        %1034 = vmatprep.subr.mxu0 0.0
        %1035 = vmatpush1.msra.mxu0 0.0
        %1036 = vmatprep.subr.mxu0 0.0
        %1037 = vmatpush1.msra.mxu0 0.0
        %1038 = vmatprep.subr.mxu0 0.0
        %1039 = vmatpush1.msra.mxu0 0.0
        %1040 = vmatprep.subr.mxu0 0.0
        %1041 = vmatpush1.msra.mxu0 0.0
        %1042 = vmatprep.subr.mxu0 0.0
        %1043 = vmatpush1.msra.mxu0 0.0
        %1044 = vmatprep.subr.mxu0 0.0
        %1045 = vmatpush1.msra.mxu0 0.0
        %1046 = vmatprep.subr.mxu0 0.0
        %1047 = vmatpush1.msra.mxu0 0.0
        %1048 = vmatprep.subr.mxu0 0.0
        %1049 = vmatpush1.msra.mxu0 0.0
        %1050 = vmatprep.subr.mxu0 0.0
        %1051 = vmatpush1.msra.mxu0 0.0
        %1052 = vmatprep.subr.mxu0 0.0
        %1053 = vmatpush1.msra.mxu0 0.0
        %1054 = vmatprep.subr.mxu0 0.0
        %1055 = vmatpush1.msra.mxu0 0.0
        %1056 = vmatprep.subr.mxu0 0.0
        %1057 = vmatpush1.msra.mxu0 0.0
        %1058 = vmatprep.subr.mxu0 0.0
        %1059 = vmatpush1.msra.mxu0 0.0
        %1060 = vmatprep.subr.mxu0 0.0
        %1061 = vmatpush1.msra.mxu0 0.0
        %1062 = vmatprep.subr.mxu0 0.0
        %1063 = vmatpush1.msra.mxu0 0.0
        %1064 = vmatprep.subr.mxu0 0.0
        %1065 = vmatpush1.msra.mxu0 0.0
        %1066 = vmatprep.subr.mxu0 0.0
        %1067 = vmatpush1.msra.mxu0 0.0
        %1068 = vmatprep.subr.mxu0 0.0
        %1069 = vmatpush1.msra.mxu0 0.0
        %1070 = vmatprep.subr.mxu0 0.0
        %1071 = vmatpush1.msra.mxu0 0.0
        %1072 = vmatprep.subr.mxu0 0.0
        %1073 = vmatpush1.msra.mxu0 0.0
        %1074 = vmatprep.mubr.f32.mxu0 0.0
        %1075 = vmatmul.mubr.f32.gmra.mrb[0].mxu0 %v1008
        %v1076 = vpop.f32.mrb[0].mxu0
        %v1077 = vadd.f32 0.0, %v1076
        %v1078 = vpop.f32.mrb[0].mxu0
        %1079 = vdwg.mxu0
        %s1080 = scalar_lea.vmem [#allocation2], 512
        %v1081 = vld [vmem:[%s1080] sm:$0xff]
        %v1082 = vld [vmem:[%s1080 + $0x8] sm:$0xff]
        %v1083 = vld [vmem:[%s1080 + $0x10] sm:$0xff]
        %v1084 = vld [vmem:[%s1080 + $0x18] sm:$0xff]
        %v1085 = vld [vmem:[%s1080 + $0x20] sm:$0xff]
        %v1086 = vld [vmem:[%s1080 + $0x28] sm:$0xff]
        %v1087 = vld [vmem:[%s1080 + $0x30] sm:$0xff]
        %v1088 = vld [vmem:[%s1080 + $0x38] sm:$0xff]
        %v1089 = vld [vmem:[%s1080 + $0x40] sm:$0xff]
        %v1090 = vld [vmem:[%s1080 + $0x48] sm:$0xff]
        %v1091 = vld [vmem:[%s1080 + $0x50] sm:$0xff]
        %v1092 = vld [vmem:[%s1080 + $0x58] sm:$0xff]
        %v1093 = vld [vmem:[%s1080 + $0x60] sm:$0xff]
        %v1094 = vld [vmem:[%s1080 + $0x68] sm:$0xff]
        %v1095 = vld [vmem:[%s1080 + $0x70] sm:$0xff]
        %v1096 = vld [vmem:[%s1080 + $0x78] sm:$0xff]
        %v1098 = vsel %vm520, %v1077, 0
        %1100 = vmatprep.subr.mxu0 %v1082
        %1101 = vmatpush1.msra.mxu0 %v1081
        %1102 = vmatprep.subr.mxu0 %v1084
        %1103 = vmatpush1.msra.mxu0 %v1083
        %1104 = vmatprep.subr.mxu0 %v1086
        %1105 = vmatpush1.msra.mxu0 %v1085
        %1106 = vmatprep.subr.mxu0 %v1088
        %1107 = vmatpush1.msra.mxu0 %v1087
        %1108 = vmatprep.subr.mxu0 %v1090
        %1109 = vmatpush1.msra.mxu0 %v1089
        %1110 = vmatprep.subr.mxu0 %v1092
        %1111 = vmatpush1.msra.mxu0 %v1091
        %1112 = vmatprep.subr.mxu0 %v1094
        %1113 = vmatpush1.msra.mxu0 %v1093
        %1114 = vmatprep.subr.mxu0 %v1096
        %1115 = vmatpush1.msra.mxu0 %v1095
        %1116 = vmatprep.subr.mxu0 0.0
        %1117 = vmatpush1.msra.mxu0 0.0
        %1118 = vmatprep.subr.mxu0 0.0
        %1119 = vmatpush1.msra.mxu0 0.0
        %1120 = vmatprep.subr.mxu0 0.0
        %1121 = vmatpush1.msra.mxu0 0.0
        %1122 = vmatprep.subr.mxu0 0.0
        %1123 = vmatpush1.msra.mxu0 0.0
        %1124 = vmatprep.subr.mxu0 0.0
        %1125 = vmatpush1.msra.mxu0 0.0
        %1126 = vmatprep.subr.mxu0 0.0
        %1127 = vmatpush1.msra.mxu0 0.0
        %1128 = vmatprep.subr.mxu0 0.0
        %1129 = vmatpush1.msra.mxu0 0.0
        %1130 = vmatprep.subr.mxu0 0.0
        %1131 = vmatpush1.msra.mxu0 0.0
        %1132 = vmatprep.subr.mxu0 0.0
        %1133 = vmatpush1.msra.mxu0 0.0
        %1134 = vmatprep.subr.mxu0 0.0
        %1135 = vmatpush1.msra.mxu0 0.0
        %1136 = vmatprep.subr.mxu0 0.0
        %1137 = vmatpush1.msra.mxu0 0.0
        %1138 = vmatprep.subr.mxu0 0.0
        %1139 = vmatpush1.msra.mxu0 0.0
        %1140 = vmatprep.subr.mxu0 0.0
        %1141 = vmatpush1.msra.mxu0 0.0
        %1142 = vmatprep.subr.mxu0 0.0
        %1143 = vmatpush1.msra.mxu0 0.0
        %1144 = vmatprep.subr.mxu0 0.0
        %1145 = vmatpush1.msra.mxu0 0.0
        %1146 = vmatprep.subr.mxu0 0.0
        %1147 = vmatpush1.msra.mxu0 0.0
        %1148 = vmatprep.subr.mxu0 0.0
        %1149 = vmatpush1.msra.mxu0 0.0
        %1150 = vmatprep.subr.mxu0 0.0
        %1151 = vmatpush1.msra.mxu0 0.0
        %1152 = vmatprep.subr.mxu0 0.0
        %1153 = vmatpush1.msra.mxu0 0.0
        %1154 = vmatprep.subr.mxu0 0.0
        %1155 = vmatpush1.msra.mxu0 0.0
        %1156 = vmatprep.subr.mxu0 0.0
        %1157 = vmatpush1.msra.mxu0 0.0
        %1158 = vmatprep.subr.mxu0 0.0
        %1159 = vmatpush1.msra.mxu0 0.0
        %1160 = vmatprep.subr.mxu0 0.0
        %1161 = vmatpush1.msra.mxu0 0.0
        %1162 = vmatprep.subr.mxu0 0.0
        %1163 = vmatpush1.msra.mxu0 0.0
        %1164 = vmatprep.mubr.f32.mxu0 0.0
        %1165 = vmatmul.mubr.f32.gmra.mrb[0].mxu0 %v1098
        %v1166 = vpop.f32.mrb[0].mxu0
        %v1167 = vadd.f32 0.0, %v1166
        %v1168 = vpop.f32.mrb[0].mxu0
        %v1169 = vadd.f32 0.0, %v1168
        %1170 = vdwg.mxu0
        %v1171 = vadd.f32 %v1003, %v1167
        %v1172 = vadd.f32 %v1004, %v1169
        %s1173 = scalar_lea.vmem %s2, 20
        %v1174 = vld [vmem:[%s1173] sm:$0xf]
        %v1176 = vsel %vm334, %v1174, 0
        %1178 = vmatprep.subr.mxu0 0.0
        %1179 = vmatpush1.msra.mxu0 %v340
        %1180 = vmatprep.subr.mxu0 0.0
        %1181 = vmatpush1.msra.mxu0 0.0
        %1182 = vmatprep.subr.mxu0 0.0
        %1183 = vmatpush1.msra.mxu0 0.0
        %1184 = vmatprep.subr.mxu0 0.0
        %1185 = vmatpush1.msra.mxu0 0.0
        %1186 = vmatprep.subr.mxu0 0.0
        %1187 = vmatpush1.msra.mxu0 0.0
        %1188 = vmatprep.subr.mxu0 0.0
        %1189 = vmatpush1.msra.mxu0 0.0
        %1190 = vmatprep.subr.mxu0 0.0
        %1191 = vmatpush1.msra.mxu0 0.0
        %1192 = vmatprep.subr.mxu0 0.0
        %1193 = vmatpush1.msra.mxu0 0.0
        %1194 = vmatprep.subr.mxu0 0.0
        %1195 = vmatpush1.msra.mxu0 0.0
        %1196 = vmatprep.subr.mxu0 0.0
        %1197 = vmatpush1.msra.mxu0 0.0
        %1198 = vmatprep.subr.mxu0 0.0
        %1199 = vmatpush1.msra.mxu0 0.0
        %1200 = vmatprep.subr.mxu0 0.0
        %1201 = vmatpush1.msra.mxu0 0.0
        %1202 = vmatprep.subr.mxu0 0.0
        %1203 = vmatpush1.msra.mxu0 0.0
        %1204 = vmatprep.subr.mxu0 0.0
        %1205 = vmatpush1.msra.mxu0 0.0
        %1206 = vmatprep.subr.mxu0 0.0
        %1207 = vmatpush1.msra.mxu0 0.0
        %1208 = vmatprep.subr.mxu0 0.0
        %1209 = vmatpush1.msra.mxu0 0.0
        %1210 = vmatprep.subr.mxu0 0.0
        %1211 = vmatpush1.msra.mxu0 0.0
        %1212 = vmatprep.subr.mxu0 0.0
        %1213 = vmatpush1.msra.mxu0 0.0
        %1214 = vmatprep.subr.mxu0 0.0
        %1215 = vmatpush1.msra.mxu0 0.0
        %1216 = vmatprep.subr.mxu0 0.0
        %1217 = vmatpush1.msra.mxu0 0.0
        %1218 = vmatprep.subr.mxu0 0.0
        %1219 = vmatpush1.msra.mxu0 0.0
        %1220 = vmatprep.subr.mxu0 0.0
        %1221 = vmatpush1.msra.mxu0 0.0
        %1222 = vmatprep.subr.mxu0 0.0
        %1223 = vmatpush1.msra.mxu0 0.0
        %1224 = vmatprep.subr.mxu0 0.0
        %1225 = vmatpush1.msra.mxu0 0.0
        %1226 = vmatprep.subr.mxu0 0.0
        %1227 = vmatpush1.msra.mxu0 0.0
        %1228 = vmatprep.subr.mxu0 0.0
        %1229 = vmatpush1.msra.mxu0 0.0
        %1230 = vmatprep.subr.mxu0 0.0
        %1231 = vmatpush1.msra.mxu0 0.0
        %1232 = vmatprep.subr.mxu0 0.0
        %1233 = vmatpush1.msra.mxu0 0.0
        %1234 = vmatprep.subr.mxu0 0.0
        %1235 = vmatpush1.msra.mxu0 0.0
        %1236 = vmatprep.subr.mxu0 0.0
        %1237 = vmatpush1.msra.mxu0 0.0
        %1238 = vmatprep.subr.mxu0 0.0
        %1239 = vmatpush1.msra.mxu0 0.0
        %1240 = vmatprep.subr.mxu0 0.0
        %1241 = vmatpush1.msra.mxu0 0.0
        %1242 = vmatprep.mubr.f32.mxu0 0.0
        %1243 = vmatmul.mubr.f32.gmra.mrb[0].mxu0 %v1176
        %v1244 = vpop.f32.mrb[0].mxu0
        %v1245 = vadd.f32 0.0, %v1244
        %v1246 = vpop.f32.mrb[0].mxu0
        %1247 = vdwg.mxu0
        %s1248 = scalar_lea.vmem [#allocation2], 640
        %v1249 = vld [vmem:[%s1248] sm:$0xff]
        %v1250 = vld [vmem:[%s1248 + $0x8] sm:$0xff]
        %v1251 = vld [vmem:[%s1248 + $0x10] sm:$0xff]
        %v1252 = vld [vmem:[%s1248 + $0x18] sm:$0xff]
        %v1253 = vld [vmem:[%s1248 + $0x20] sm:$0xff]
        %v1254 = vld [vmem:[%s1248 + $0x28] sm:$0xff]
        %v1255 = vld [vmem:[%s1248 + $0x30] sm:$0xff]
        %v1256 = vld [vmem:[%s1248 + $0x38] sm:$0xff]
        %v1257 = vld [vmem:[%s1248 + $0x40] sm:$0xff]
        %v1258 = vld [vmem:[%s1248 + $0x48] sm:$0xff]
        %v1259 = vld [vmem:[%s1248 + $0x50] sm:$0xff]
        %v1260 = vld [vmem:[%s1248 + $0x58] sm:$0xff]
        %v1261 = vld [vmem:[%s1248 + $0x60] sm:$0xff]
        %v1262 = vld [vmem:[%s1248 + $0x68] sm:$0xff]
        %v1263 = vld [vmem:[%s1248 + $0x70] sm:$0xff]
        %v1264 = vld [vmem:[%s1248 + $0x78] sm:$0xff]
        %v1266 = vsel %vm520, %v1245, 0
        %1268 = vmatprep.subr.mxu0 %v1250
        %1269 = vmatpush1.msra.mxu0 %v1249
        %1270 = vmatprep.subr.mxu0 %v1252
        %1271 = vmatpush1.msra.mxu0 %v1251
        %1272 = vmatprep.subr.mxu0 %v1254
        %1273 = vmatpush1.msra.mxu0 %v1253
        %1274 = vmatprep.subr.mxu0 %v1256
        %1275 = vmatpush1.msra.mxu0 %v1255
        %1276 = vmatprep.subr.mxu0 %v1258
        %1277 = vmatpush1.msra.mxu0 %v1257
        %1278 = vmatprep.subr.mxu0 %v1260
        %1279 = vmatpush1.msra.mxu0 %v1259
        %1280 = vmatprep.subr.mxu0 %v1262
        %1281 = vmatpush1.msra.mxu0 %v1261
        %1282 = vmatprep.subr.mxu0 %v1264
        %1283 = vmatpush1.msra.mxu0 %v1263
        %1284 = vmatprep.subr.mxu0 0.0
        %1285 = vmatpush1.msra.mxu0 0.0
        %1286 = vmatprep.subr.mxu0 0.0
        %1287 = vmatpush1.msra.mxu0 0.0
        %1288 = vmatprep.subr.mxu0 0.0
        %1289 = vmatpush1.msra.mxu0 0.0
        %1290 = vmatprep.subr.mxu0 0.0
        %1291 = vmatpush1.msra.mxu0 0.0
        %1292 = vmatprep.subr.mxu0 0.0
        %1293 = vmatpush1.msra.mxu0 0.0
        %1294 = vmatprep.subr.mxu0 0.0
        %1295 = vmatpush1.msra.mxu0 0.0
        %1296 = vmatprep.subr.mxu0 0.0
        %1297 = vmatpush1.msra.mxu0 0.0
        %1298 = vmatprep.subr.mxu0 0.0
        %1299 = vmatpush1.msra.mxu0 0.0
        %1300 = vmatprep.subr.mxu0 0.0
        %1301 = vmatpush1.msra.mxu0 0.0
        %1302 = vmatprep.subr.mxu0 0.0
        %1303 = vmatpush1.msra.mxu0 0.0
        %1304 = vmatprep.subr.mxu0 0.0
        %1305 = vmatpush1.msra.mxu0 0.0
        %1306 = vmatprep.subr.mxu0 0.0
        %1307 = vmatpush1.msra.mxu0 0.0
        %1308 = vmatprep.subr.mxu0 0.0
        %1309 = vmatpush1.msra.mxu0 0.0
        %1310 = vmatprep.subr.mxu0 0.0
        %1311 = vmatpush1.msra.mxu0 0.0
        %1312 = vmatprep.subr.mxu0 0.0
        %1313 = vmatpush1.msra.mxu0 0.0
        %1314 = vmatprep.subr.mxu0 0.0
        %1315 = vmatpush1.msra.mxu0 0.0
        %1316 = vmatprep.subr.mxu0 0.0
        %1317 = vmatpush1.msra.mxu0 0.0
        %1318 = vmatprep.subr.mxu0 0.0
        %1319 = vmatpush1.msra.mxu0 0.0
        %1320 = vmatprep.subr.mxu0 0.0
        %1321 = vmatpush1.msra.mxu0 0.0
        %1322 = vmatprep.subr.mxu0 0.0
        %1323 = vmatpush1.msra.mxu0 0.0
        %1324 = vmatprep.subr.mxu0 0.0
        %1325 = vmatpush1.msra.mxu0 0.0
        %1326 = vmatprep.subr.mxu0 0.0
        %1327 = vmatpush1.msra.mxu0 0.0
        %1328 = vmatprep.subr.mxu0 0.0
        %1329 = vmatpush1.msra.mxu0 0.0
        %1330 = vmatprep.subr.mxu0 0.0
        %1331 = vmatpush1.msra.mxu0 0.0
        %1332 = vmatprep.mubr.f32.mxu0 0.0
        %1333 = vmatmul.mubr.f32.gmra.mrb[0].mxu0 %v1266
        %v1334 = vpop.f32.mrb[0].mxu0
        %v1335 = vadd.f32 0.0, %v1334
        %v1336 = vpop.f32.mrb[0].mxu0
        %v1337 = vadd.f32 0.0, %v1336
        %1338 = vdwg.mxu0
        %v1339 = vadd.f32 %v1171, %v1335
        %v1340 = vadd.f32 %v1172, %v1337
        %s1341 = scalar_lea.vmem %s2, 24
        %v1342 = vld [vmem:[%s1341] sm:$0xf]
        %v1344 = vsel %vm334, %v1342, 0
        %1346 = vmatprep.subr.mxu0 0.0
        %1347 = vmatpush1.msra.mxu0 %v340
        %1348 = vmatprep.subr.mxu0 0.0
        %1349 = vmatpush1.msra.mxu0 0.0
        %1350 = vmatprep.subr.mxu0 0.0
        %1351 = vmatpush1.msra.mxu0 0.0
        %1352 = vmatprep.subr.mxu0 0.0
        %1353 = vmatpush1.msra.mxu0 0.0
        %1354 = vmatprep.subr.mxu0 0.0
        %1355 = vmatpush1.msra.mxu0 0.0
        %1356 = vmatprep.subr.mxu0 0.0
        %1357 = vmatpush1.msra.mxu0 0.0
        %1358 = vmatprep.subr.mxu0 0.0
        %1359 = vmatpush1.msra.mxu0 0.0
        %1360 = vmatprep.subr.mxu0 0.0
        %1361 = vmatpush1.msra.mxu0 0.0
        %1362 = vmatprep.subr.mxu0 0.0
        %1363 = vmatpush1.msra.mxu0 0.0
        %1364 = vmatprep.subr.mxu0 0.0
        %1365 = vmatpush1.msra.mxu0 0.0
        %1366 = vmatprep.subr.mxu0 0.0
        %1367 = vmatpush1.msra.mxu0 0.0
        %1368 = vmatprep.subr.mxu0 0.0
        %1369 = vmatpush1.msra.mxu0 0.0
        %1370 = vmatprep.subr.mxu0 0.0
        %1371 = vmatpush1.msra.mxu0 0.0
        %1372 = vmatprep.subr.mxu0 0.0
        %1373 = vmatpush1.msra.mxu0 0.0
        %1374 = vmatprep.subr.mxu0 0.0
        %1375 = vmatpush1.msra.mxu0 0.0
        %1376 = vmatprep.subr.mxu0 0.0
        %1377 = vmatpush1.msra.mxu0 0.0
        %1378 = vmatprep.subr.mxu0 0.0
        %1379 = vmatpush1.msra.mxu0 0.0
        %1380 = vmatprep.subr.mxu0 0.0
        %1381 = vmatpush1.msra.mxu0 0.0
        %1382 = vmatprep.subr.mxu0 0.0
        %1383 = vmatpush1.msra.mxu0 0.0
        %1384 = vmatprep.subr.mxu0 0.0
        %1385 = vmatpush1.msra.mxu0 0.0
        %1386 = vmatprep.subr.mxu0 0.0
        %1387 = vmatpush1.msra.mxu0 0.0
        %1388 = vmatprep.subr.mxu0 0.0
        %1389 = vmatpush1.msra.mxu0 0.0
        %1390 = vmatprep.subr.mxu0 0.0
        %1391 = vmatpush1.msra.mxu0 0.0
        %1392 = vmatprep.subr.mxu0 0.0
        %1393 = vmatpush1.msra.mxu0 0.0
        %1394 = vmatprep.subr.mxu0 0.0
        %1395 = vmatpush1.msra.mxu0 0.0
        %1396 = vmatprep.subr.mxu0 0.0
        %1397 = vmatpush1.msra.mxu0 0.0
        %1398 = vmatprep.subr.mxu0 0.0
        %1399 = vmatpush1.msra.mxu0 0.0
        %1400 = vmatprep.subr.mxu0 0.0
        %1401 = vmatpush1.msra.mxu0 0.0
        %1402 = vmatprep.subr.mxu0 0.0
        %1403 = vmatpush1.msra.mxu0 0.0
        %1404 = vmatprep.subr.mxu0 0.0
        %1405 = vmatpush1.msra.mxu0 0.0
        %1406 = vmatprep.subr.mxu0 0.0
        %1407 = vmatpush1.msra.mxu0 0.0
        %1408 = vmatprep.subr.mxu0 0.0
        %1409 = vmatpush1.msra.mxu0 0.0
        %1410 = vmatprep.mubr.f32.mxu0 0.0
        %1411 = vmatmul.mubr.f32.gmra.mrb[0].mxu0 %v1344
        %v1412 = vpop.f32.mrb[0].mxu0
        %v1413 = vadd.f32 0.0, %v1412
        %v1414 = vpop.f32.mrb[0].mxu0
        %1415 = vdwg.mxu0
        %s1416 = scalar_lea.vmem [#allocation2], 768
        %v1417 = vld [vmem:[%s1416] sm:$0xff]
        %v1418 = vld [vmem:[%s1416 + $0x8] sm:$0xff]
        %v1419 = vld [vmem:[%s1416 + $0x10] sm:$0xff]
        %v1420 = vld [vmem:[%s1416 + $0x18] sm:$0xff]
        %v1421 = vld [vmem:[%s1416 + $0x20] sm:$0xff]
        %v1422 = vld [vmem:[%s1416 + $0x28] sm:$0xff]
        %v1423 = vld [vmem:[%s1416 + $0x30] sm:$0xff]
        %v1424 = vld [vmem:[%s1416 + $0x38] sm:$0xff]
        %v1425 = vld [vmem:[%s1416 + $0x40] sm:$0xff]
        %v1426 = vld [vmem:[%s1416 + $0x48] sm:$0xff]
        %v1427 = vld [vmem:[%s1416 + $0x50] sm:$0xff]
        %v1428 = vld [vmem:[%s1416 + $0x58] sm:$0xff]
        %v1429 = vld [vmem:[%s1416 + $0x60] sm:$0xff]
        %v1430 = vld [vmem:[%s1416 + $0x68] sm:$0xff]
        %v1431 = vld [vmem:[%s1416 + $0x70] sm:$0xff]
        %v1432 = vld [vmem:[%s1416 + $0x78] sm:$0xff]
        %v1434 = vsel %vm520, %v1413, 0
        %1436 = vmatprep.subr.mxu0 %v1418
        %1437 = vmatpush1.msra.mxu0 %v1417
        %1438 = vmatprep.subr.mxu0 %v1420
        %1439 = vmatpush1.msra.mxu0 %v1419
        %1440 = vmatprep.subr.mxu0 %v1422
        %1441 = vmatpush1.msra.mxu0 %v1421
        %1442 = vmatprep.subr.mxu0 %v1424
        %1443 = vmatpush1.msra.mxu0 %v1423
        %1444 = vmatprep.subr.mxu0 %v1426
        %1445 = vmatpush1.msra.mxu0 %v1425
        %1446 = vmatprep.subr.mxu0 %v1428
        %1447 = vmatpush1.msra.mxu0 %v1427
        %1448 = vmatprep.subr.mxu0 %v1430
        %1449 = vmatpush1.msra.mxu0 %v1429
        %1450 = vmatprep.subr.mxu0 %v1432
        %1451 = vmatpush1.msra.mxu0 %v1431
        %1452 = vmatprep.subr.mxu0 0.0
        %1453 = vmatpush1.msra.mxu0 0.0
        %1454 = vmatprep.subr.mxu0 0.0
        %1455 = vmatpush1.msra.mxu0 0.0
        %1456 = vmatprep.subr.mxu0 0.0
        %1457 = vmatpush1.msra.mxu0 0.0
        %1458 = vmatprep.subr.mxu0 0.0
        %1459 = vmatpush1.msra.mxu0 0.0
        %1460 = vmatprep.subr.mxu0 0.0
        %1461 = vmatpush1.msra.mxu0 0.0
        %1462 = vmatprep.subr.mxu0 0.0
        %1463 = vmatpush1.msra.mxu0 0.0
        %1464 = vmatprep.subr.mxu0 0.0
        %1465 = vmatpush1.msra.mxu0 0.0
        %1466 = vmatprep.subr.mxu0 0.0
        %1467 = vmatpush1.msra.mxu0 0.0
        %1468 = vmatprep.subr.mxu0 0.0
        %1469 = vmatpush1.msra.mxu0 0.0
        %1470 = vmatprep.subr.mxu0 0.0
        %1471 = vmatpush1.msra.mxu0 0.0
        %1472 = vmatprep.subr.mxu0 0.0
        %1473 = vmatpush1.msra.mxu0 0.0
        %1474 = vmatprep.subr.mxu0 0.0
        %1475 = vmatpush1.msra.mxu0 0.0
        %1476 = vmatprep.subr.mxu0 0.0
        %1477 = vmatpush1.msra.mxu0 0.0
        %1478 = vmatprep.subr.mxu0 0.0
        %1479 = vmatpush1.msra.mxu0 0.0
        %1480 = vmatprep.subr.mxu0 0.0
        %1481 = vmatpush1.msra.mxu0 0.0
        %1482 = vmatprep.subr.mxu0 0.0
        %1483 = vmatpush1.msra.mxu0 0.0
        %1484 = vmatprep.subr.mxu0 0.0
        %1485 = vmatpush1.msra.mxu0 0.0
        %1486 = vmatprep.subr.mxu0 0.0
        %1487 = vmatpush1.msra.mxu0 0.0
        %1488 = vmatprep.subr.mxu0 0.0
        %1489 = vmatpush1.msra.mxu0 0.0
        %1490 = vmatprep.subr.mxu0 0.0
        %1491 = vmatpush1.msra.mxu0 0.0
        %1492 = vmatprep.subr.mxu0 0.0
        %1493 = vmatpush1.msra.mxu0 0.0
        %1494 = vmatprep.subr.mxu0 0.0
        %1495 = vmatpush1.msra.mxu0 0.0
        %1496 = vmatprep.subr.mxu0 0.0
        %1497 = vmatpush1.msra.mxu0 0.0
        %1498 = vmatprep.subr.mxu0 0.0
        %1499 = vmatpush1.msra.mxu0 0.0
        %1500 = vmatprep.mubr.f32.mxu0 0.0
        %1501 = vmatmul.mubr.f32.gmra.mrb[0].mxu0 %v1434
        %v1502 = vpop.f32.mrb[0].mxu0
        %v1503 = vadd.f32 0.0, %v1502
        %v1504 = vpop.f32.mrb[0].mxu0
        %v1505 = vadd.f32 0.0, %v1504
        %1506 = vdwg.mxu0
        %v1507 = vadd.f32 %v1339, %v1503
        %v1508 = vadd.f32 %v1340, %v1505
        %s1509 = scalar_lea.vmem %s2, 28
        %v1510 = vld [vmem:[%s1509] sm:$0xf]
        %v1512 = vsel %vm334, %v1510, 0
        %1514 = vmatprep.subr.mxu0 0.0
        %1515 = vmatpush1.msra.mxu0 %v340
        %1516 = vmatprep.subr.mxu0 0.0
        %1517 = vmatpush1.msra.mxu0 0.0
        %1518 = vmatprep.subr.mxu0 0.0
        %1519 = vmatpush1.msra.mxu0 0.0
        %1520 = vmatprep.subr.mxu0 0.0
        %1521 = vmatpush1.msra.mxu0 0.0
        %1522 = vmatprep.subr.mxu0 0.0
        %1523 = vmatpush1.msra.mxu0 0.0
        %1524 = vmatprep.subr.mxu0 0.0
        %1525 = vmatpush1.msra.mxu0 0.0
        %1526 = vmatprep.subr.mxu0 0.0
        %1527 = vmatpush1.msra.mxu0 0.0
        %1528 = vmatprep.subr.mxu0 0.0
        %1529 = vmatpush1.msra.mxu0 0.0
        %1530 = vmatprep.subr.mxu0 0.0
        %1531 = vmatpush1.msra.mxu0 0.0
        %1532 = vmatprep.subr.mxu0 0.0
        %1533 = vmatpush1.msra.mxu0 0.0
        %1534 = vmatprep.subr.mxu0 0.0
        %1535 = vmatpush1.msra.mxu0 0.0
        %1536 = vmatprep.subr.mxu0 0.0
        %1537 = vmatpush1.msra.mxu0 0.0
        %1538 = vmatprep.subr.mxu0 0.0
        %1539 = vmatpush1.msra.mxu0 0.0
        %1540 = vmatprep.subr.mxu0 0.0
        %1541 = vmatpush1.msra.mxu0 0.0
        %1542 = vmatprep.subr.mxu0 0.0
        %1543 = vmatpush1.msra.mxu0 0.0
        %1544 = vmatprep.subr.mxu0 0.0
        %1545 = vmatpush1.msra.mxu0 0.0
        %1546 = vmatprep.subr.mxu0 0.0
        %1547 = vmatpush1.msra.mxu0 0.0
        %1548 = vmatprep.subr.mxu0 0.0
        %1549 = vmatpush1.msra.mxu0 0.0
        %1550 = vmatprep.subr.mxu0 0.0
        %1551 = vmatpush1.msra.mxu0 0.0
        %1552 = vmatprep.subr.mxu0 0.0
        %1553 = vmatpush1.msra.mxu0 0.0
        %1554 = vmatprep.subr.mxu0 0.0
        %1555 = vmatpush1.msra.mxu0 0.0
        %1556 = vmatprep.subr.mxu0 0.0
        %1557 = vmatpush1.msra.mxu0 0.0
        %1558 = vmatprep.subr.mxu0 0.0
        %1559 = vmatpush1.msra.mxu0 0.0
        %1560 = vmatprep.subr.mxu0 0.0
        %1561 = vmatpush1.msra.mxu0 0.0
        %1562 = vmatprep.subr.mxu0 0.0
        %1563 = vmatpush1.msra.mxu0 0.0
        %1564 = vmatprep.subr.mxu0 0.0
        %1565 = vmatpush1.msra.mxu0 0.0
        %1566 = vmatprep.subr.mxu0 0.0
        %1567 = vmatpush1.msra.mxu0 0.0
        %1568 = vmatprep.subr.mxu0 0.0
        %1569 = vmatpush1.msra.mxu0 0.0
        %1570 = vmatprep.subr.mxu0 0.0
        %1571 = vmatpush1.msra.mxu0 0.0
        %1572 = vmatprep.subr.mxu0 0.0
        %1573 = vmatpush1.msra.mxu0 0.0
        %1574 = vmatprep.subr.mxu0 0.0
        %1575 = vmatpush1.msra.mxu0 0.0
        %1576 = vmatprep.subr.mxu0 0.0
        %1577 = vmatpush1.msra.mxu0 0.0
        %1578 = vmatprep.mubr.f32.mxu0 0.0
        %1579 = vmatmul.mubr.f32.gmra.mrb[0].mxu0 %v1512
        %v1580 = vpop.f32.mrb[0].mxu0
        %v1581 = vadd.f32 0.0, %v1580
        %v1582 = vpop.f32.mrb[0].mxu0
        %1583 = vdwg.mxu0
        %s1584 = scalar_lea.vmem [#allocation2], 896
        %v1585 = vld [vmem:[%s1584] sm:$0xff]
        %v1586 = vld [vmem:[%s1584 + $0x8] sm:$0xff]
        %v1587 = vld [vmem:[%s1584 + $0x10] sm:$0xff]
        %v1588 = vld [vmem:[%s1584 + $0x18] sm:$0xff]
        %v1589 = vld [vmem:[%s1584 + $0x20] sm:$0xff]
        %v1590 = vld [vmem:[%s1584 + $0x28] sm:$0xff]
        %v1591 = vld [vmem:[%s1584 + $0x30] sm:$0xff]
        %v1592 = vld [vmem:[%s1584 + $0x38] sm:$0xff]
        %v1593 = vld [vmem:[%s1584 + $0x40] sm:$0xff]
        %v1594 = vld [vmem:[%s1584 + $0x48] sm:$0xff]
        %v1595 = vld [vmem:[%s1584 + $0x50] sm:$0xff]
        %v1596 = vld [vmem:[%s1584 + $0x58] sm:$0xff]
        %v1597 = vld [vmem:[%s1584 + $0x60] sm:$0xff]
        %v1598 = vld [vmem:[%s1584 + $0x68] sm:$0xff]
        %v1599 = vld [vmem:[%s1584 + $0x70] sm:$0xff]
        %v1600 = vld [vmem:[%s1584 + $0x78] sm:$0xff]
        %v1602 = vsel %vm520, %v1581, 0
        %1604 = vmatprep.subr.mxu0 %v1586
        %1605 = vmatpush1.msra.mxu0 %v1585
        %1606 = vmatprep.subr.mxu0 %v1588
        %1607 = vmatpush1.msra.mxu0 %v1587
        %1608 = vmatprep.subr.mxu0 %v1590
        %1609 = vmatpush1.msra.mxu0 %v1589
        %1610 = vmatprep.subr.mxu0 %v1592
        %1611 = vmatpush1.msra.mxu0 %v1591
        %1612 = vmatprep.subr.mxu0 %v1594
        %1613 = vmatpush1.msra.mxu0 %v1593
        %1614 = vmatprep.subr.mxu0 %v1596
        %1615 = vmatpush1.msra.mxu0 %v1595
        %1616 = vmatprep.subr.mxu0 %v1598
        %1617 = vmatpush1.msra.mxu0 %v1597
        %1618 = vmatprep.subr.mxu0 %v1600
        %1619 = vmatpush1.msra.mxu0 %v1599
        %1620 = vmatprep.subr.mxu0 0.0
        %1621 = vmatpush1.msra.mxu0 0.0
        %1622 = vmatprep.subr.mxu0 0.0
        %1623 = vmatpush1.msra.mxu0 0.0
        %1624 = vmatprep.subr.mxu0 0.0
        %1625 = vmatpush1.msra.mxu0 0.0
        %1626 = vmatprep.subr.mxu0 0.0
        %1627 = vmatpush1.msra.mxu0 0.0
        %1628 = vmatprep.subr.mxu0 0.0
        %1629 = vmatpush1.msra.mxu0 0.0
        %1630 = vmatprep.subr.mxu0 0.0
        %1631 = vmatpush1.msra.mxu0 0.0
        %1632 = vmatprep.subr.mxu0 0.0
        %1633 = vmatpush1.msra.mxu0 0.0
        %1634 = vmatprep.subr.mxu0 0.0
        %1635 = vmatpush1.msra.mxu0 0.0
        %1636 = vmatprep.subr.mxu0 0.0
        %1637 = vmatpush1.msra.mxu0 0.0
        %1638 = vmatprep.subr.mxu0 0.0
        %1639 = vmatpush1.msra.mxu0 0.0
        %1640 = vmatprep.subr.mxu0 0.0
        %1641 = vmatpush1.msra.mxu0 0.0
        %1642 = vmatprep.subr.mxu0 0.0
        %1643 = vmatpush1.msra.mxu0 0.0
        %1644 = vmatprep.subr.mxu0 0.0
        %1645 = vmatpush1.msra.mxu0 0.0
        %1646 = vmatprep.subr.mxu0 0.0
        %1647 = vmatpush1.msra.mxu0 0.0
        %1648 = vmatprep.subr.mxu0 0.0
        %1649 = vmatpush1.msra.mxu0 0.0
        %1650 = vmatprep.subr.mxu0 0.0
        %1651 = vmatpush1.msra.mxu0 0.0
        %1652 = vmatprep.subr.mxu0 0.0
        %1653 = vmatpush1.msra.mxu0 0.0
        %1654 = vmatprep.subr.mxu0 0.0
        %1655 = vmatpush1.msra.mxu0 0.0
        %1656 = vmatprep.subr.mxu0 0.0
        %1657 = vmatpush1.msra.mxu0 0.0
        %1658 = vmatprep.subr.mxu0 0.0
        %1659 = vmatpush1.msra.mxu0 0.0
        %1660 = vmatprep.subr.mxu0 0.0
        %1661 = vmatpush1.msra.mxu0 0.0
        %1662 = vmatprep.subr.mxu0 0.0
        %1663 = vmatpush1.msra.mxu0 0.0
        %1664 = vmatprep.subr.mxu0 0.0
        %1665 = vmatpush1.msra.mxu0 0.0
        %1666 = vmatprep.subr.mxu0 0.0
        %1667 = vmatpush1.msra.mxu0 0.0
        %1668 = vmatprep.mubr.f32.mxu0 0.0
        %1669 = vmatmul.mubr.f32.gmra.mrb[0].mxu0 %v1602
        %v1670 = vpop.f32.mrb[0].mxu0
        %v1671 = vadd.f32 0.0, %v1670
        %v1672 = vpop.f32.mrb[0].mxu0
        %v1673 = vadd.f32 0.0, %v1672
        %1674 = vdwg.mxu0
        %v1675 = vadd.f32 %v1507, %v1671
        %v1676 = vadd.f32 %v1508, %v1673
        %s1677 = scalar_lea.vmem %s2, 32
        %v1678 = vld [vmem:[%s1677] sm:$0xf]
        %v1680 = vsel %vm334, %v1678, 0
        %1682 = vmatprep.subr.mxu0 0.0
        %1683 = vmatpush1.msra.mxu0 %v340
        %1684 = vmatprep.subr.mxu0 0.0
        %1685 = vmatpush1.msra.mxu0 0.0
        %1686 = vmatprep.subr.mxu0 0.0
        %1687 = vmatpush1.msra.mxu0 0.0
        %1688 = vmatprep.subr.mxu0 0.0
        %1689 = vmatpush1.msra.mxu0 0.0
        %1690 = vmatprep.subr.mxu0 0.0
        %1691 = vmatpush1.msra.mxu0 0.0
        %1692 = vmatprep.subr.mxu0 0.0
        %1693 = vmatpush1.msra.mxu0 0.0
        %1694 = vmatprep.subr.mxu0 0.0
        %1695 = vmatpush1.msra.mxu0 0.0
        %1696 = vmatprep.subr.mxu0 0.0
        %1697 = vmatpush1.msra.mxu0 0.0
        %1698 = vmatprep.subr.mxu0 0.0
        %1699 = vmatpush1.msra.mxu0 0.0
        %1700 = vmatprep.subr.mxu0 0.0
        %1701 = vmatpush1.msra.mxu0 0.0
        %1702 = vmatprep.subr.mxu0 0.0
        %1703 = vmatpush1.msra.mxu0 0.0
        %1704 = vmatprep.subr.mxu0 0.0
        %1705 = vmatpush1.msra.mxu0 0.0
        %1706 = vmatprep.subr.mxu0 0.0
        %1707 = vmatpush1.msra.mxu0 0.0
        %1708 = vmatprep.subr.mxu0 0.0
        %1709 = vmatpush1.msra.mxu0 0.0
        %1710 = vmatprep.subr.mxu0 0.0
        %1711 = vmatpush1.msra.mxu0 0.0
        %1712 = vmatprep.subr.mxu0 0.0
        %1713 = vmatpush1.msra.mxu0 0.0
        %1714 = vmatprep.subr.mxu0 0.0
        %1715 = vmatpush1.msra.mxu0 0.0
        %1716 = vmatprep.subr.mxu0 0.0
        %1717 = vmatpush1.msra.mxu0 0.0
        %1718 = vmatprep.subr.mxu0 0.0
        %1719 = vmatpush1.msra.mxu0 0.0
        %1720 = vmatprep.subr.mxu0 0.0
        %1721 = vmatpush1.msra.mxu0 0.0
        %1722 = vmatprep.subr.mxu0 0.0
        %1723 = vmatpush1.msra.mxu0 0.0
        %1724 = vmatprep.subr.mxu0 0.0
        %1725 = vmatpush1.msra.mxu0 0.0
        %1726 = vmatprep.subr.mxu0 0.0
        %1727 = vmatpush1.msra.mxu0 0.0
        %1728 = vmatprep.subr.mxu0 0.0
        %1729 = vmatpush1.msra.mxu0 0.0
        %1730 = vmatprep.subr.mxu0 0.0
        %1731 = vmatpush1.msra.mxu0 0.0
        %1732 = vmatprep.subr.mxu0 0.0
        %1733 = vmatpush1.msra.mxu0 0.0
        %1734 = vmatprep.subr.mxu0 0.0
        %1735 = vmatpush1.msra.mxu0 0.0
        %1736 = vmatprep.subr.mxu0 0.0
        %1737 = vmatpush1.msra.mxu0 0.0
        %1738 = vmatprep.subr.mxu0 0.0
        %1739 = vmatpush1.msra.mxu0 0.0
        %1740 = vmatprep.subr.mxu0 0.0
        %1741 = vmatpush1.msra.mxu0 0.0
        %1742 = vmatprep.subr.mxu0 0.0
        %1743 = vmatpush1.msra.mxu0 0.0
        %1744 = vmatprep.subr.mxu0 0.0
        %1745 = vmatpush1.msra.mxu0 0.0
        %1746 = vmatprep.mubr.f32.mxu0 0.0
        %1747 = vmatmul.mubr.f32.gmra.mrb[0].mxu0 %v1680
        %v1748 = vpop.f32.mrb[0].mxu0
        %v1749 = vadd.f32 0.0, %v1748
        %v1750 = vpop.f32.mrb[0].mxu0
        %1751 = vdwg.mxu0
        %s1752 = scalar_lea.vmem [#allocation2], 1024
        %v1753 = vld [vmem:[%s1752] sm:$0xff]
        %v1754 = vld [vmem:[%s1752 + $0x8] sm:$0xff]
        %v1755 = vld [vmem:[%s1752 + $0x10] sm:$0xff]
        %v1756 = vld [vmem:[%s1752 + $0x18] sm:$0xff]
        %v1757 = vld [vmem:[%s1752 + $0x20] sm:$0xff]
        %v1758 = vld [vmem:[%s1752 + $0x28] sm:$0xff]
        %v1759 = vld [vmem:[%s1752 + $0x30] sm:$0xff]
        %v1760 = vld [vmem:[%s1752 + $0x38] sm:$0xff]
        %v1761 = vld [vmem:[%s1752 + $0x40] sm:$0xff]
        %v1762 = vld [vmem:[%s1752 + $0x48] sm:$0xff]
        %v1763 = vld [vmem:[%s1752 + $0x50] sm:$0xff]
        %v1764 = vld [vmem:[%s1752 + $0x58] sm:$0xff]
        %v1765 = vld [vmem:[%s1752 + $0x60] sm:$0xff]
        %v1766 = vld [vmem:[%s1752 + $0x68] sm:$0xff]
        %v1767 = vld [vmem:[%s1752 + $0x70] sm:$0xff]
        %v1768 = vld [vmem:[%s1752 + $0x78] sm:$0xff]
        %v1770 = vsel %vm520, %v1749, 0
        %1772 = vmatprep.subr.mxu0 %v1754
        %1773 = vmatpush1.msra.mxu0 %v1753
        %1774 = vmatprep.subr.mxu0 %v1756
        %1775 = vmatpush1.msra.mxu0 %v1755
        %1776 = vmatprep.subr.mxu0 %v1758
        %1777 = vmatpush1.msra.mxu0 %v1757
        %1778 = vmatprep.subr.mxu0 %v1760
        %1779 = vmatpush1.msra.mxu0 %v1759
        %1780 = vmatprep.subr.mxu0 %v1762
        %1781 = vmatpush1.msra.mxu0 %v1761
        %1782 = vmatprep.subr.mxu0 %v1764
        %1783 = vmatpush1.msra.mxu0 %v1763
        %1784 = vmatprep.subr.mxu0 %v1766
        %1785 = vmatpush1.msra.mxu0 %v1765
        %1786 = vmatprep.subr.mxu0 %v1768
        %1787 = vmatpush1.msra.mxu0 %v1767
        %1788 = vmatprep.subr.mxu0 0.0
        %1789 = vmatpush1.msra.mxu0 0.0
        %1790 = vmatprep.subr.mxu0 0.0
        %1791 = vmatpush1.msra.mxu0 0.0
        %1792 = vmatprep.subr.mxu0 0.0
        %1793 = vmatpush1.msra.mxu0 0.0
        %1794 = vmatprep.subr.mxu0 0.0
        %1795 = vmatpush1.msra.mxu0 0.0
        %1796 = vmatprep.subr.mxu0 0.0
        %1797 = vmatpush1.msra.mxu0 0.0
        %1798 = vmatprep.subr.mxu0 0.0
        %1799 = vmatpush1.msra.mxu0 0.0
        %1800 = vmatprep.subr.mxu0 0.0
        %1801 = vmatpush1.msra.mxu0 0.0
        %1802 = vmatprep.subr.mxu0 0.0
        %1803 = vmatpush1.msra.mxu0 0.0
        %1804 = vmatprep.subr.mxu0 0.0
        %1805 = vmatpush1.msra.mxu0 0.0
        %1806 = vmatprep.subr.mxu0 0.0
        %1807 = vmatpush1.msra.mxu0 0.0
        %1808 = vmatprep.subr.mxu0 0.0
        %1809 = vmatpush1.msra.mxu0 0.0
        %1810 = vmatprep.subr.mxu0 0.0
        %1811 = vmatpush1.msra.mxu0 0.0
        %1812 = vmatprep.subr.mxu0 0.0
        %1813 = vmatpush1.msra.mxu0 0.0
        %1814 = vmatprep.subr.mxu0 0.0
        %1815 = vmatpush1.msra.mxu0 0.0
        %1816 = vmatprep.subr.mxu0 0.0
        %1817 = vmatpush1.msra.mxu0 0.0
        %1818 = vmatprep.subr.mxu0 0.0
        %1819 = vmatpush1.msra.mxu0 0.0
        %1820 = vmatprep.subr.mxu0 0.0
        %1821 = vmatpush1.msra.mxu0 0.0
        %1822 = vmatprep.subr.mxu0 0.0
        %1823 = vmatpush1.msra.mxu0 0.0
        %1824 = vmatprep.subr.mxu0 0.0
        %1825 = vmatpush1.msra.mxu0 0.0
        %1826 = vmatprep.subr.mxu0 0.0
        %1827 = vmatpush1.msra.mxu0 0.0
        %1828 = vmatprep.subr.mxu0 0.0
        %1829 = vmatpush1.msra.mxu0 0.0
        %1830 = vmatprep.subr.mxu0 0.0
        %1831 = vmatpush1.msra.mxu0 0.0
        %1832 = vmatprep.subr.mxu0 0.0
        %1833 = vmatpush1.msra.mxu0 0.0
        %1834 = vmatprep.subr.mxu0 0.0
        %1835 = vmatpush1.msra.mxu0 0.0
        %1836 = vmatprep.mubr.f32.mxu0 0.0
        %1837 = vmatmul.mubr.f32.gmra.mrb[0].mxu0 %v1770
        %v1838 = vpop.f32.mrb[0].mxu0
        %v1839 = vadd.f32 0.0, %v1838
        %v1840 = vpop.f32.mrb[0].mxu0
        %v1841 = vadd.f32 0.0, %v1840
        %1842 = vdwg.mxu0
        %v1843 = vadd.f32 %v1675, %v1839
        %v1844 = vadd.f32 %v1676, %v1841
        %v1845 = vsel %vm338, %v1843, 0.0
        %v1846 = vsel %vm338, %v1844, 0.0
        %v1847 = vadd.f32 %v1845, %v1846
        %1848 = vadd.xlane.f32.xlu0 %v1847
        %v1849 = vpop.xlane.xlu0 %1848
        %v1850 = vmul.f32 %v1843, %v1843
        %v1851 = vmul.f32 %v1844, %v1844
        %v1852 = vsel %vm338, %v1850, 0.0
        %v1853 = vsel %vm338, %v1851, 0.0
        %v1854 = vadd.f32 %v1852, %v1853
        %1855 = vadd.xlane.f32.xlu0 %v1854
        %v1856 = vpop.xlane.xlu0 %1855
        %v1857 = vmul.f32 %v1849, 0.00390625
        %v1858 = vmul.f32 %v1856, 0.00390625
        %v1859 = vmul.f32 %v1857, %v1857
        %v1860 = vsub.f32 %v1858, %v1859
        %v1861 = vmax.f32 %v1860, 0.0
        %v1862 = vsub.f32 %v1843, %v1857
        %v1863 = vsub.f32 %v1844, %v1857
        %v1864 = vadd.f32 %v1861, 1e-05
        %v1865 = vrsqrt.pop %v1864
        %v1866 = vmul.f32 %v1862, %v1865
        %v1867 = vmul.f32 %v1863, %v1865
        %v1868 = vmax.f32 %v1866, 0.0
        %v1869 = vmax.f32 %v1867, 0.0
        %v1870 = vld [vmem:[%s4] sm:$0xff]
        %v1872 = vsel %vm334, %v1870, 0
        %v1875 = vsel %vm338, %v1868, 0
        %v1878 = vsel %vm338, %v1869, 0
        %1880 = vmatprep.subr.mxu0 %v1878
        %1881 = vmatpush1.msra.mxu0 %v1875
        %1882 = vmatprep.subr.mxu0 0.0
        %1883 = vmatpush1.msra.mxu0 0.0
        %1884 = vmatprep.subr.mxu0 0.0
        %1885 = vmatpush1.msra.mxu0 0.0
        %1886 = vmatprep.subr.mxu0 0.0
        %1887 = vmatpush1.msra.mxu0 0.0
        %1888 = vmatprep.subr.mxu0 0.0
        %1889 = vmatpush1.msra.mxu0 0.0
        %1890 = vmatprep.subr.mxu0 0.0
        %1891 = vmatpush1.msra.mxu0 0.0
        %1892 = vmatprep.subr.mxu0 0.0
        %1893 = vmatpush1.msra.mxu0 0.0
        %1894 = vmatprep.subr.mxu0 0.0
        %1895 = vmatpush1.msra.mxu0 0.0
        %1896 = vmatprep.subr.mxu0 0.0
        %1897 = vmatpush1.msra.mxu0 0.0
        %1898 = vmatprep.subr.mxu0 0.0
        %1899 = vmatpush1.msra.mxu0 0.0
        %1900 = vmatprep.subr.mxu0 0.0
        %1901 = vmatpush1.msra.mxu0 0.0
        %1902 = vmatprep.subr.mxu0 0.0
        %1903 = vmatpush1.msra.mxu0 0.0
        %1904 = vmatprep.subr.mxu0 0.0
        %1905 = vmatpush1.msra.mxu0 0.0
        %1906 = vmatprep.subr.mxu0 0.0
        %1907 = vmatpush1.msra.mxu0 0.0
        %1908 = vmatprep.subr.mxu0 0.0
        %1909 = vmatpush1.msra.mxu0 0.0
        %1910 = vmatprep.subr.mxu0 0.0
        %1911 = vmatpush1.msra.mxu0 0.0
        %1912 = vmatprep.subr.mxu0 0.0
        %1913 = vmatpush1.msra.mxu0 0.0
        %1914 = vmatprep.subr.mxu0 0.0
        %1915 = vmatpush1.msra.mxu0 0.0
        %1916 = vmatprep.subr.mxu0 0.0
        %1917 = vmatpush1.msra.mxu0 0.0
        %1918 = vmatprep.subr.mxu0 0.0
        %1919 = vmatpush1.msra.mxu0 0.0
        %1920 = vmatprep.subr.mxu0 0.0
        %1921 = vmatpush1.msra.mxu0 0.0
        %1922 = vmatprep.subr.mxu0 0.0
        %1923 = vmatpush1.msra.mxu0 0.0
        %1924 = vmatprep.subr.mxu0 0.0
        %1925 = vmatpush1.msra.mxu0 0.0
        %1926 = vmatprep.subr.mxu0 0.0
        %1927 = vmatpush1.msra.mxu0 0.0
        %1928 = vmatprep.subr.mxu0 0.0
        %1929 = vmatpush1.msra.mxu0 0.0
        %1930 = vmatprep.subr.mxu0 0.0
        %1931 = vmatpush1.msra.mxu0 0.0
        %1932 = vmatprep.subr.mxu0 0.0
        %1933 = vmatpush1.msra.mxu0 0.0
        %1934 = vmatprep.subr.mxu0 0.0
        %1935 = vmatpush1.msra.mxu0 0.0
        %1936 = vmatprep.subr.mxu0 0.0
        %1937 = vmatpush1.msra.mxu0 0.0
        %1938 = vmatprep.subr.mxu0 0.0
        %1939 = vmatpush1.msra.mxu0 0.0
        %1940 = vmatprep.subr.mxu0 0.0
        %1941 = vmatpush1.msra.mxu0 0.0
        %1942 = vmatprep.subr.mxu0 0.0
        %1943 = vmatpush1.msra.mxu0 0.0
        %1944 = vmatprep.mubr.f32.mxu0 0.0
        %1945 = vmatmul.mubr.f32.gmra.mrb[0].mxu0 %v1872
        %v1946 = vpop.f32.mrb[0].mxu0
        %v1947 = vadd.f32 0.0, %v1946
        %v1948 = vpop.f32.mrb[0].mxu0
        %v1949 = vadd.f32 0.0, %v1948
        %1950 = vdwg.mxu0
        %v1951 = vadd.f32 %v1947, %v1949
        %1952 = vadd.xlane.f32.xlu0 %v1951
        %v1953 = vpop.xlane.xlu0 %1952
        %v1954 = vmul.f32 %v1947, %v1947
        %v1955 = vmul.f32 %v1949, %v1949
        %v1956 = vadd.f32 %v1954, %v1955
        %1957 = vadd.xlane.f32.xlu0 %v1956
        %v1958 = vpop.xlane.xlu0 %1957
        %v1959 = vmul.f32 %v1953, 0.00390625
        %v1960 = vmul.f32 %v1958, 0.00390625
        %v1961 = vmul.f32 %v1959, %v1959
        %v1962 = vsub.f32 %v1960, %v1961
        %v1963 = vmax.f32 %v1962, 0.0
        %v1964 = vsub.f32 %v1947, %v1959
        %v1965 = vsub.f32 %v1949, %v1959
        %v1966 = vadd.f32 %v1963, 1e-05
        %v1967 = vrsqrt.pop %v1966
        %v1968 = vmul.f32 %v1964, %v1967
        %v1969 = vmul.f32 %v1965, %v1967
        %v1970 = vmax.f32 %v1968, 0.0
        %v1971 = vmax.f32 %v1969, 0.0
        %1972 = vst [vmem:[%s232] sm:$0xff] %v1970
        %1973 = vst [vmem:[%s232 + $0x8] sm:$0xff] %v1971
        %s1974 = sand.u32 %s138, 1
        %s1975 = scalar_lea.sflag [#allocation4], %s1974
        %s1976 = sand.u32 %s138, 1
        %s1977 = smul.addr %s1976, 16
        %s1978 = scalar_lea.vmem [#allocation5], %s1977
        // Predicated region
        $region45: #{tpu_custom_call.1} parent=39 // pred_check
          %p1979 = pneg %p148
        $region46: #{tpu_custom_call.1} parent=39 // pred_check_branch
          %1981 = sbr.rel (%p1979) target = $region48
        $region47: #{tpu_custom_call.1} parent=39 // pred_region
          %s1983 = ssub.s32 256, 256
          %1984 = vsyncadd %s1975, %s1983
          %s1985 = smul.addr %s20, 2
          %s1986 = smul.addr %s1985, 128
          %s1987 = scalar_lea.hbm %s5, %s1986
          %s1989 = sshll.u32 %s1978, 4
          %s1990 = int_to_ptr.vmem [resolvable:$true] %s1989
          %1992 = dma.vmem_to_hbm [thread:$0]  %s1990, 256, %s1987, %s1975
        $region48: #{tpu_custom_call.1} parent=39 // pred_fallthru
          _
      $region40: #{tpu_custom_call.1} parent=5 // pred_fallthru
        _
      %p1993 = scmp.le.s32.totalorder 2, %s15
      // Predicated region
      $region49: #{tpu_custom_call.1} parent=5 // pred_check
        %p1994 = pneg %p1993
      $region50: #{tpu_custom_call.1} parent=5 // pred_check_branch
        %1996 = sbr.rel (%p1994) target = $region52
      $region51: #{tpu_custom_call.1} parent=5 // pred_region
        %s1997 = ssub.s32 %s15, 2
        // Predicated region
        $region53: #{tpu_custom_call.1} parent=51 // pred_check
          %p1998 = pneg %p154
        $region54: #{tpu_custom_call.1} parent=51 // pred_check_branch
          %2000 = sbr.rel (%p1998) target = $region56
        $region55: #{tpu_custom_call.1} parent=51 // pred_region
          %s2001 = sand.u32 %s139, 1
          %s2002 = scalar_lea.sflag [#allocation4], %s2001
          %s2003 = sand.u32 %s139, 1
          %s2004 = smul.addr %s2003, 16
          %s2005 = scalar_lea.vmem [#allocation5], %s2004
          %2006 = dma.done %s2002, 256
        $region56: #{tpu_custom_call.1} parent=51 // pred_fallthru
          _
      $region52: #{tpu_custom_call.1} parent=5 // pred_fallthru
        _
    $region6: #{tpu_custom_call.1} parent=1 // loop_footer
      %s19 = sadd.s32 1, %s15
    $region7: #{tpu_custom_call.1} parent=1 // loop_footer_branch
      %14 = sbr.rel target = $region3
    $region8: #{tpu_custom_call.1} parent=1 // loop_exit
      _
    %2007 = vsyncpa [#allocation3], 1
    %s2008 = scalar_lea.sflag [#allocation3], 1
    %2009 = vsyncpa %s2008, 1
    %2010 = vsyncpa [#allocation4], 1
    %s2011 = scalar_lea.sflag [#allocation4], 1
    %2012 = vsyncpa %s2011, 1

</llo_original>
